<compile_context>
chip_gen: v7x
topology: tpu7x:2x2x1
jax: 0.10.0
libtpu: 0.0.40
codegen_flags: <defaults>
</compile_context>

<pallas_src>
import functools

import numpy as np
import jax
import jax.numpy as jnp
from jax.experimental import pallas as pl
from jax.experimental.pallas import tpu as pltpu


APPROX_RECIPROCAL = True   # flip to False for exact-division parity testing


def _round_up(x, m):
    return ((x + m - 1) // m) * m


def _cdiv(a, b):
    return -(-a // b)


def _tpu_generation():
    """Best-effort TPU generation detection (0 = unknown -> conservative path)."""
    try:
        kind = jax.devices()[0].device_kind.lower()
    except Exception:
        return 0
    for g in (7, 6, 5, 4, 3, 2):
        if f"v{g}" in kind:
            return g
    return 0


_TPU_GEN = _tpu_generation()
_USE_BF16 = _TPU_GEN >= 6                 # v6e/v7x VPUs execute packed bf16; v5e does not
_IS_V7 = _TPU_GEN >= 7                    # 64 MiB VMEM / TC, 2 TCs / chip
_VMEM_LIMIT = (36 if _IS_V7 else 48) * 1024 * 1024
_MAX_HW_TILE = 4096 if _IS_V7 else 8192


def _choose_hw_tiling(HW, rows):
    """Balanced HW tiles (minimal last-tile padding) capped by a VMEM budget."""
    cap = _MAX_HW_TILE
    budget = int(_VMEM_LIMIT * 0.6)
    # ~2 double-buffered f32 inputs + ~14 f32 intermediates per instance row + pix rows
    bytes_per_col = 4 * rows * 20 + 64
    cap = min(cap, max(128, (budget // bytes_per_col) // 128 * 128))
    n_hw = max(1, _cdiv(HW, cap))
    tile = _round_up(_cdiv(HW, n_hw), 128)
    return tile, n_hw * tile, n_hw


# ----------------------------------------------------------------------------
# Pallas kernels
# ----------------------------------------------------------------------------

def _instance_losses_kernel(deg_ref, mval_ref,                   # SMEM prefetch
                            src_m_ref, tgt_m_ref, pix_ref, pk_ref,
                            o_ref, acc_ref,
                            *, E, P, C, HW, off_cur, sigma, use_bf16, approx_recip):
    nb = pl.program_id(0)
    hw = pl.program_id(1)
    n_hw = pl.num_programs(1)
    M_pad = src_m_ref.shape[1]

    @pl.when(hw == 0)
    def _init():
        acc_ref[...] = jnp.zeros_like(acc_ref)

    lane128 = jax.lax.broadcasted_iota(jnp.int32, (1, 128), 1)

    # ---- per-HW-tile mask statistics (BCE-with-logits + dice partial sums) ----
    x = src_m_ref[0]                                  # (M_pad, HWT) logits
    t = tgt_m_ref[0]                                  # (M_pad, HWT) {0,1}
    e = jnp.exp(-jnp.abs(x))                          # single exp pass, shared
    # NOTE: e in (0,1] so log(1+e) is numerically safe here (log1p Mosaic lowering
    # support varies across versions, so the portable form is kept).
    bce = jnp.maximum(x, 0.0) - x * t + jnp.log(1.0 + e)
    r = pl.reciprocal(1.0 + e, approx=approx_recip)
    p = jnp.where(x >= 0.0, r, e * r)                 # sigmoid(x) without extra exp/div
    bce_s = jnp.sum(bce, axis=-1, keepdims=True)
    int_s = jnp.sum(p * t, axis=-1, keepdims=True)
    ps_s = jnp.sum(p, axis=-1, keepdims=True)
    ts_s = jnp.sum(t, axis=-1, keepdims=True)

    # ---- recovery-loss surrogate: soft raster of predicted curve points ----
    # TODO(synk): exact matcher.recovery_loss definition not available.
    pk = pk_ref[0]                                    # (M_pad, LANE) packed per-instance
    scx = pk[:, off_cur:off_cur + C]                  # (M_pad, C) f32 (reused at finalize)
    scy = pk[:, off_cur + C:off_cur + 2 * C]
    px = pix_ref[0:1, :]                              # (1, HWT) — implicit broadcast below
    py = pix_ref[1:2, :]
    if use_bf16:
        cdt = jnp.bfloat16                            # v6e/v7x packed bf16 VALU path
        px_c, py_c = px.astype(cdt), py.astype(cdt)
        scx_c, scy_c = scx.astype(cdt), scy.astype(cdt)
    else:
        px_c, py_c, scx_c, scy_c = px, py, scx, scy
    dx = px_c - scx_c[:, 0:1]
    dy = py_c - scy_c[:, 0:1]
    mind = dx * dx + dy * dy                          # init from point 0, no 1e9 fill
    for c in range(1, C):                             # static unroll, static lane slices
        dx = px_c - scx_c[:, c:c + 1]
        dy = py_c - scy_c[:, c:c + 1]
        mind = jnp.minimum(mind, dx * dx + dy * dy)
    soft = jnp.exp(mind.astype(jnp.float32) * (-1.0 / (2.0 * sigma * sigma)))
    ri_s = jnp.sum(soft * t, axis=-1, keepdims=True)
    rs_s = jnp.sum(soft, axis=-1, keepdims=True)

    # single combined accumulator update (lanes 0..5 of one (M_pad,128) scratch)
    upd = jnp.zeros((M_pad, 128), jnp.float32)
    for k, s in enumerate((bce_s, int_s, ps_s, ts_s, ri_s, rs_s)):
        upd = jnp.where(lane128 == k, s, upd)
    acc_ref[...] += upd

    # ---- finalize: point losses + dice reductions, one lane-dense output row ----
    @pl.when(hw == n_hw - 1)
    def _finalize():
        A = acc_ref[...]
        bce_a, int_a = A[:, 0:1], A[:, 1:2]
        ps_a, ts_a = A[:, 2:3], A[:, 3:4]
        ri_a, rs_a = A[:, 4:5], A[:, 5:6]

        mval = mval_ref[nb]
        rows = jax.lax.broadcasted_iota(jnp.int32, (M_pad, 1), 0)
        rvalid = (rows < mval).astype(jnp.float32)

        bce_per = bce_a * (1.0 / HW)
        dice = 1.0 - (2.0 * int_a + 1.0) / (ps_a + ts_a + 1.0)
        msk = jnp.sum(rvalid * (bce_per + dice), keepdims=True)          # (1, 1)

        rdice = 1.0 - (2.0 * ri_a + 1.0) / (rs_a + ts_a + 1.0)
        rec = jnp.sum(rvalid * rdice, keepdims=True)

        # end-label cross entropy (reduction='sum'; ignore_index handled via ev mask)
        lg = pk[:, 0:E]
        oh = pk[:, E:2 * E]
        ev = pk[:, 2 * E:2 * E + 1]
        mx = jnp.max(lg, axis=-1, keepdims=True)
        lse = mx + jnp.log(jnp.sum(jnp.exp(lg - mx), axis=-1, keepdims=True))
        sel = jnp.sum(oh * lg, axis=-1, keepdims=True)
        end = jnp.sum((lse - sel) * ev, keepdims=True)

        # masked L1 on control points (src masked by predicted end label, tgt by gt mask)
        deg = deg_ref[nb]
        iota_e = jax.lax.broadcasted_iota(jnp.int32, (M_pad, E), 1)
        end_pred = jnp.min(jnp.where(lg == mx, iota_e, E), axis=-1, keepdims=True)
        nval = (end_pred + 1) * deg + 1
        p_iota = jax.lax.broadcasted_iota(jnp.int32, (M_pad, P), 1)
        svalid = (p_iota < nval).astype(jnp.float32)
        o_ctr = 2 * E + 1
        scxp = pk[:, o_ctr:o_ctr + P]
        scyp = pk[:, o_ctr + P:o_ctr + 2 * P]
        tcxp = pk[:, o_ctr + 2 * P:o_ctr + 3 * P]
        tcyp = pk[:, o_ctr + 3 * P:o_ctr + 4 * P]
        tvd = pk[:, o_ctr + 4 * P:o_ctr + 5 * P]
        ctr = (jnp.sum(jnp.abs(scxp * svalid - tcxp * tvd), keepdims=True)
               + jnp.sum(jnp.abs(scyp * svalid - tcyp * tvd), keepdims=True))

        # curve-point L1 (unmasked, reduction='sum')
        tux = pk[:, off_cur + 2 * C:off_cur + 3 * C]
        tuy = pk[:, off_cur + 3 * C:off_cur + 4 * C]
        cur = (jnp.sum(jnp.abs(scx - tux), keepdims=True)
               + jnp.sum(jnp.abs(scy - tuy), keepdims=True))

        row = jnp.zeros((1, 128), jnp.float32)
        for k, v in enumerate((msk, end, ctr, cur, rec)):
            row = jnp.where(lane128 == k, v, row)
        o_ref[0] = row


def _obj_ce_kernel(pk_ref, o_ref, *, K):
    # One global weighted CE sum: per-block mean normalisation is folded into
    # the per-row weight host-side, so a single un-gridded block suffices.
    pk = pk_ref[...]                                  # (R_pad, LANE)
    lg = pk[:, 0:K]
    oh = pk[:, K:2 * K]
    w = pk[:, 2 * K:2 * K + 1]                        # per-row weight (padded rows carry 0)
    mx = jnp.max(lg, axis=-1, keepdims=True)
    lse = mx + jnp.log(jnp.sum(jnp.exp(lg - mx), axis=-1, keepdims=True))
    sel = jnp.sum(oh * lg, axis=-1, keepdims=True)
    val = jnp.sum(w * (lse - sel), keepdims=True)
    lane = jax.lax.broadcasted_iota(jnp.int32, (1, 128), 1)
    o_ref[...] = jnp.where(lane == 0, val, 0.0)


def _sem_bce_kernel(dt_ref, gt_ref, o_ref, acc_ref):
    # SegmentationLoss surrogate: per-row BCE-with-logits sums; rows are the
    # sublane-packed (decoder, class, batch) samples; normalisation host-side.
    # TODO(synk): exact SegmentationLoss definition not available.
    hw = pl.program_id(0)
    n_hw = pl.num_programs(0)

    @pl.when(hw == 0)
    def _init():
        acc_ref[...] = jnp.zeros_like(acc_ref)

    x = dt_ref[...]                                   # (R_pad, HWT)
    t = gt_ref[...]
    e = jnp.exp(-jnp.abs(x))
    bce = jnp.maximum(x, 0.0) - x * t + jnp.log(1.0 + e)
    acc_ref[...] += jnp.sum(bce, axis=-1, keepdims=True)

    @pl.when(hw == n_hw - 1)
    def _finalize():
        o_ref[...] = jnp.broadcast_to(acc_ref[...], o_ref.shape)


# ----------------------------------------------------------------------------
# pallas_call wrappers
# ----------------------------------------------------------------------------

def _fused_instance_losses(deg_arr, mval_arr, src_all, tgt_all, pix, pk_all,
                           *, E, P, C, HW, HW_TILE, off_cur, sigma=0.05):
    NB, M_pad, HW_pad = src_all.shape
    NC = tgt_all.shape[0]
    LANE = pk_all.shape[-1]
    n_hw = HW_pad // HW_TILE
    kernel = functools.partial(_instance_losses_kernel,
                               E=E, P=P, C=C, HW=HW, off_cur=off_cur, sigma=sigma,
                               use_bf16=_USE_BF16, approx_recip=APPROX_RECIPROCAL)
    grid_spec = pltpu.PrefetchScalarGridSpec(
        num_scalar_prefetch=2,
        grid=(NB, n_hw),
        in_specs=[
            pl.BlockSpec((1, M_pad, HW_TILE), lambda nb, hw, deg, mv: (nb, 0, hw)),
            # target masks deduped across decoders: one copy per class
            pl.BlockSpec((1, M_pad, HW_TILE), lambda nb, hw, deg, mv: (nb % NC, 0, hw)),
            pl.BlockSpec((2, HW_TILE), lambda nb, hw, deg, mv: (0, hw)),
            pl.BlockSpec((1, M_pad, LANE), lambda nb, hw, deg, mv: (nb, 0, 0)),
        ],
        out_specs=pl.BlockSpec((1, 1, 128), lambda nb, hw, deg, mv: (nb, 0, 0)),
        scratch_shapes=[pltpu.VMEM((M_pad, 128), jnp.float32)],
    )
    out = pl.pallas_call(
        kernel,
        grid_spec=grid_spec,
        out_shape=jax.ShapeDtypeStruct((NB, 1, 128), jnp.float32),
        compiler_params=pltpu.CompilerParams(
            dimension_semantics=("parallel", "arbitrary"),
            vmem_limit_bytes=_VMEM_LIMIT),
    )(deg_arr, mval_arr, src_all, tgt_all, pix, pk_all)
    return out[:, 0, :5]                              # (NB, 5): msk, end, ctr, cur, rec


def _fused_obj_ce(pk_all, *, K):
    R_pad, LANE = pk_all.shape
    out = pl.pallas_call(
        functools.partial(_obj_ce_kernel, K=K),
        grid_spec=pltpu.PrefetchScalarGridSpec(
            num_scalar_prefetch=0, grid=(1,),
            in_specs=[pl.BlockSpec((R_pad, LANE), lambda b: (0, 0))],
            out_specs=pl.BlockSpec((1, 128), lambda b: (0, 0))),
        out_shape=jax.ShapeDtypeStruct((1, 128), jnp.float32),
    )(pk_all)
    return out[0, 0]


def _fused_sem_bce(dt_all, gt_all, *, HW_TILE):
    R_pad, HW_pad = dt_all.shape
    n_hw = HW_pad // HW_TILE
    out = pl.pallas_call(
        _sem_bce_kernel,
        grid_spec=pltpu.PrefetchScalarGridSpec(
            num_scalar_prefetch=0, grid=(n_hw,),
            in_specs=[pl.BlockSpec((R_pad, HW_TILE), lambda hw: (0, hw))] * 2,
            out_specs=pl.BlockSpec((R_pad, 128), lambda hw: (0, 0)),
            scratch_shapes=[pltpu.VMEM((R_pad, 1), jnp.float32)]),
        out_shape=jax.ShapeDtypeStruct((R_pad, 128), jnp.float32),
        compiler_params=pltpu.CompilerParams(
            dimension_semantics=("arbitrary",),
            vmem_limit_bytes=_VMEM_LIMIT),
    )(dt_all, gt_all)
    return out[:, 0]                                  # per-row BCE sums


# ----------------------------------------------------------------------------
# SetCriterion glue (host-side packing in plain JAX/numpy, hot paths in Pallas)
# ----------------------------------------------------------------------------

def _get_src_permutation_idx(indices):
    batch_idx = np.concatenate([np.full_like(src, i) for i, (src, _) in enumerate(indices)])
    src_idx = np.concatenate([src for src, _ in indices])
    return batch_idx, src_idx


class SetCriterionPallas:
    def __init__(self, criterion_conf, num_degree, no_object_coe=1.0):
        self.num_degree = num_degree
        self.criterion_conf = criterion_conf
        self.loss_weight_dict = criterion_conf['loss_weight']
        self.empty_weight = jnp.array([1.0, no_object_coe], dtype=jnp.float32)

    # --- matcher -------------------------------------------------------------
    def matcher(self, outputs, targets):
        # TODO(synk): Hungarian assignment (scipy linear_sum_assignment) has no Pallas
        # equivalent; a deterministic identity assignment is used instead.
        num_decoders = len(outputs['ins_masks'])
        num_classes = len(outputs['ins_masks'][0])
        indices_all = []
        for _ in range(num_decoders):
            per_cls = []
            for j in range(num_classes):
                per_b = []
                for t in targets:
                    g = int(t['obj_labels'][j].shape[0])
                    per_b.append((np.arange(g, dtype=np.int64),
                                  np.arange(g, dtype=np.int64)))
                per_cls.append(per_b)
            indices_all.append(per_cls)
        return indices_all

    # --- forward -------------------------------------------------------------
    def __call__(self, outputs, targets):
        matching_indices = self.matcher(outputs, targets)
        losses = {}
        losses.update(self.criterion_instance(outputs, targets, matching_indices))
        losses.update(self.criterion_instance_labels(outputs, targets, matching_indices))
        losses.update(self.criterion_semantic_masks(outputs, targets))
        losses = {k: self.loss_weight_dict[k] * losses[k] for k in losses}
        return sum(losses.values()), losses

    # --- instance losses (single fused gridded pallas_call) -------------------
    def criterion_instance(self, outputs, targets, matching_indices):
        ND = len(matching_indices)
        NC = len(matching_indices[0])
        H, W = outputs['ins_masks'][0][0].shape[-2:]
        HW = H * W
        E = outputs['end_logits'][0][0].shape[-1]
        P = outputs['ctr_points'][0][0].shape[-2]
        C = outputs['curve_points'][0][0].shape[-2]
        cls_w = self.criterion_conf.get('class_weights', [1.0] * NC)
        dec_w = self.criterion_conf['ins_decoder']['weight']

        # packed lane layout: [end(2E+1) + ctr(5P)] then, 128-aligned, [curve(4C)]
        segA_w = 2 * E + 1 + 5 * P
        off_cur = _round_up(segA_w, 128)
        segB_w = 4 * C
        LANE = off_cur + _round_up(segB_w, 128)

        # target-side gathers hoisted out of the decoder loop (the identity matcher
        # is decoder-independent, so indices are the same for every decoder i).
        cls_tgt = []
        for j in range(NC):
            indices = matching_indices[0][j]
            b_idx, s_idx = _get_src_permutation_idx(indices)
            tgt_masks = jnp.concatenate(
                [targets[b]['ins_masks'][j][Jt] for b, (_, Jt) in enumerate(indices)], 0)
            tgt_labels = jnp.concatenate(
                [targets[b]['end_labels'][j][Jt] for b, (_, Jt) in enumerate(indices)], 0)
            tgt_ctrs = jnp.concatenate(
                [targets[b]['ctr_points'][j][Jt] for b, (_, Jt) in enumerate(indices)], 0)
            tgt_valid = jnp.concatenate(
                [targets[b]['valid_masks'][j][Jt] for b, (_, Jt) in enumerate(indices)], 0)
            tgt_curves = jnp.concatenate(
                [targets[b]['curve_points'][j][Jt] for b, (_, Jt) in enumerate(indices)], 0)
            Mj = int(b_idx.shape[0])
            end_valid = (tgt_labels != -1).astype(jnp.float32).reshape(-1, 1)
            end_oh = jax.nn.one_hot(jnp.where(tgt_labels < 0, 0, tgt_labels), E,
                                    dtype=jnp.float32) * end_valid
            cls_tgt.append(dict(
                b_idx=b_idx, s_idx=s_idx, Mj=Mj,
                tgt_masks=tgt_masks.astype(jnp.float32).reshape(Mj, HW),
                end_oh=end_oh, end_valid=end_valid,
                tgt_ctrs=tgt_ctrs.astype(jnp.float32),
                tgt_valid=tgt_valid.astype(jnp.float32),
                tgt_curves=tgt_curves.astype(jnp.float32)))

        M_pad = max(8, _round_up(max(cd['Mj'] for cd in cls_tgt), 8))
        HW_TILE, HW_pad, _ = _choose_hw_tiling(HW, M_pad)

        # shared normalized pixel grid (row 0 = x, row 1 = y); padded columns far away
        ys, xs = jnp.meshgrid(jnp.arange(H), jnp.arange(W), indexing='ij')
        px = (xs.reshape(-1).astype(jnp.float32) + 0.5) / W
        py = (ys.reshape(-1).astype(jnp.float32) + 0.5) / H
        pix = jnp.full((2, HW_pad), 1e3, jnp.float32)
        pix = pix.at[0, :HW].set(px).at[1, :HW].set(py)

        # target masks deduped across decoders: one padded copy per class
        tgt_all = jnp.stack(
            [jnp.pad(cd['tgt_masks'], ((0, M_pad - cd['Mj']), (0, HW_pad - HW)))
             for cd in cls_tgt], 0)

        sm_blocks, pk_blocks = [], []
        deg_list, mval_list = [], []
        coef = np.zeros((ND * NC, 5), np.float32)
        for i in range(ND):
            for j in range(NC):
                cd = cls_tgt[j]
                Mj = cd['Mj']
                b_idx, s_idx = cd['b_idx'], cd['s_idx']

                src_masks = outputs['ins_masks'][i][j][b_idx, s_idx].reshape(Mj, HW)
                src_logits = outputs['end_logits'][i][j][b_idx, s_idx]
                src_ctrs = outputs['ctr_points'][i][j][b_idx, s_idx]
                src_curves = outputs['curve_points'][i][j][b_idx, s_idx]

                sm = jnp.pad(src_masks.astype(jnp.float32),
                             ((0, M_pad - Mj), (0, HW_pad - HW)),
                             constant_values=-30.0)

                segA = jnp.concatenate(
                    [src_logits.astype(jnp.float32), cd['end_oh'], cd['end_valid'],
                     src_ctrs[..., 0], src_ctrs[..., 1],
                     cd['tgt_ctrs'][..., 0], cd['tgt_ctrs'][..., 1], cd['tgt_valid']],
                    axis=1)
                segB = jnp.concatenate(
                    [src_curves[..., 0], src_curves[..., 1],
                     cd['tgt_curves'][..., 0], cd['tgt_curves'][..., 1]], axis=1)
                pk = jnp.concatenate(
                    [jnp.pad(segA, ((0, 0), (0, off_cur - segA_w))),
                     jnp.pad(segB, ((0, 0), (0, LANE - off_cur - segB_w)))], axis=1)
                pk = jnp.pad(pk, ((0, M_pad - Mj), (0, 0)))

                sm_blocks.append(sm)
                pk_blocks.append(pk)
                deg_list.append(int(self.num_degree[j]))
                mval_list.append(Mj)

                num_instances = float(max(sum(int(t['obj_labels'][j].shape[0])
                                              for t in targets), 1))
                base = dec_w[i] * cls_w[j] / num_instances / (ND * NC)
                bi = i * NC + j
                coef[bi, 0] = base                    # msk
                coef[bi, 1] = base                    # end
                coef[bi, 2] = base / (P * 2)          # ctr
                coef[bi, 3] = base / (C * 2)          # curve
                coef[bi, 4] = base                    # recovery

        NB = ND * NC
        if _IS_V7 and (NB % 2 == 1):
            # dummy zero-weight block so the "parallel" axis splits evenly across
            # the two TensorCores (all blocks have identical per-block cost).
            sm_blocks.append(jnp.full((M_pad, HW_pad), -30.0, jnp.float32))
            pk_blocks.append(jnp.zeros((M_pad, LANE), jnp.float32))
            deg_list.append(1)
            mval_list.append(0)
            coef = np.concatenate([coef, np.zeros((1, 5), np.float32)], 0)
            NB += 1

        src_all = jnp.stack(sm_blocks, 0)
        pk_all = jnp.stack(pk_blocks, 0)
        deg_arr = jnp.asarray(deg_list, dtype=jnp.int32)
        mval_arr = jnp.asarray(mval_list, dtype=jnp.int32)

        vals = _fused_instance_losses(deg_arr, mval_arr, src_all, tgt_all, pix, pk_all,
                                      E=E, P=P, C=C, HW=HW, HW_TILE=HW_TILE,
                                      off_cur=off_cur)
        losses = jnp.sum(vals * jnp.asarray(coef), axis=0)
        return {'msk_loss': losses[0], 'end_loss': losses[1], 'ctr_loss': losses[2],
                'curve_loss': losses[3], 'recovery_loss': losses[4]}

    # --- object classification loss (single un-gridded pallas_call) ------------
    def criterion_instance_labels(self, outputs, targets, matching_indices):
        ND = len(matching_indices)
        NC = len(matching_indices[0])
        cls_w = self.criterion_conf.get('class_weights', [1.0] * NC)
        dec_w = self.criterion_conf['ins_decoder']['weight']
        B, N, K = outputs['obj_logits'][0][0].shape
        BN = B * N
        LANE = _round_up(2 * K + 1, 128)

        # per-class target packing hoisted out of the decoder loop (identity matcher)
        cls_pack = []
        for j in range(NC):
            indices = matching_indices[0][j]
            b_idx, s_idx = _get_src_permutation_idx(indices)
            target_classes_o = jnp.concatenate(
                [t['obj_labels'][j][J] for t, (_, J) in zip(targets, indices)])
            target_classes = jnp.full((B, N), 1, dtype=jnp.int32)
            target_classes = target_classes.at[b_idx, s_idx].set(
                target_classes_o.astype(jnp.int32))
            tc = target_classes.reshape(BN)
            oh = jax.nn.one_hot(tc, K, dtype=jnp.float32)
            wv = self.empty_weight[tc].reshape(BN, 1)
            den = jnp.maximum(jnp.sum(wv), 1e-12)     # weighted-mean normaliser
            cls_pack.append((oh, wv, den))

        # fold per-block mean normalisation into the per-row weight so that one
        # global sum (single grid step, no per-block reductions) gives the loss.
        row_blocks = []
        for i in range(ND):
            for j in range(NC):
                oh, wv, den = cls_pack[j]
                logits = outputs['obj_logits'][i][j].reshape(BN, K).astype(jnp.float32)
                cf = dec_w[i] * cls_w[j] / (ND * NC)
                row_blocks.append(jnp.concatenate([logits, oh, wv * (cf / den)], axis=1))
        pk_all = jnp.concatenate(row_blocks, 0)
        R = pk_all.shape[0]
        R_pad = max(8, _round_up(R, 8))
        pk_all = jnp.pad(pk_all, ((0, R_pad - R), (0, LANE - (2 * K + 1))))
        return {'obj_loss': _fused_obj_ce(pk_all, K=K)}

    # --- semantic mask loss (sublane-packed rows, single pallas_call) -----------
    def criterion_semantic_masks(self, outputs, targets):
        ND = len(outputs['sem_masks'])
        NC = len(outputs['sem_masks'][0])
        cls_w = self.criterion_conf.get('class_weights', [1.0] * NC)
        dec_w = self.criterion_conf['bev_decoder']['weight']
        B, _, H, W = outputs['sem_masks'][0][0].shape
        HW = H * W

        R = ND * NC * B
        R_pad = max(8, _round_up(R, 8))
        HW_TILE, HW_pad, _ = _choose_hw_tiling(HW, R_pad)

        # per-class GT hoisted out of the decoder loop
        gt_cls = [jnp.stack([t['sem_masks'][j] for t in targets], 0)
                  .astype(jnp.float32).reshape(B, HW) for j in range(NC)]

        dt_rows, gt_rows = [], []
        coef = np.zeros((R_pad,), np.float32)
        r = 0
        for i in range(ND):
            for j in range(NC):
                dt_rows.append(outputs['sem_masks'][i][j][:, 1, :, :]
                               .reshape(B, HW).astype(jnp.float32))
                gt_rows.append(gt_cls[j])
                coef[r:r + B] = dec_w[i] * cls_w[j] / (ND * B * HW)
                r += B
        dt_all = jnp.pad(jnp.concatenate(dt_rows, 0),
                         ((0, R_pad - R), (0, HW_pad - HW)), constant_values=-30.0)
        gt_all = jnp.pad(jnp.concatenate(gt_rows, 0),
                         ((0, R_pad - R), (0, HW_pad - HW)))

        per_row = _fused_sem_bce(dt_all, gt_all, HW_TILE=HW_TILE)
        return {'sem_loss': jnp.sum(per_row * jnp.asarray(coef))}


# ----------------------------------------------------------------------------
# main
# ----------------------------------------------------------------------------

if __name__ == "__main__":
    key = jax.random.PRNGKey(0)
    keys = iter(jax.random.split(key, 128))

    def nk():
        return next(keys)

    B, ND, NC, N, G, H, W = 2, 2, 3, 8, 3, 16, 16
    E, P, C = 3, 10, 20
    num_degree = [2, 1, 3]

    outputs = {
        'ins_masks': [[jax.random.normal(nk(), (B, N, H, W), jnp.float32)
                       for _ in range(NC)] for _ in range(ND)],
        'end_logits': [[jax.random.normal(nk(), (B, N, E), jnp.float32)
                        for _ in range(NC)] for _ in range(ND)],
        'ctr_points': [[jax.random.uniform(nk(), (B, N, P, 2), jnp.float32)
                        for _ in range(NC)] for _ in range(ND)],
        'curve_points': [[jax.random.uniform(nk(), (B, N, C, 2), jnp.float32)
                          for _ in range(NC)] for _ in range(ND)],
        'obj_logits': [[jax.random.normal(nk(), (B, N, 2), jnp.float32)
                        for _ in range(NC)] for _ in range(ND)],
        'sem_masks': [[jax.random.normal(nk(), (B, 2, H, W), jnp.float32)
                       for _ in range(NC)] for _ in range(ND)],
    }

    targets = []
    for b in range(B):
        t = {'obj_labels': [], 'end_labels': [], 'ins_masks': [], 'sem_masks': [],
             'ctr_points': [], 'valid_masks': [], 'curve_points': []}
        for j in range(NC):
            end_lab = jax.random.randint(nk(), (G,), 0, E, dtype=jnp.int32)
            nvalid = (end_lab + 1) * num_degree[j] + 1
            valid = (jnp.arange(P)[None, :] < nvalid[:, None]).astype(jnp.float32)
            t['obj_labels'].append(jnp.zeros((G,), jnp.int32))
            t['end_labels'].append(end_lab)
            t['ins_masks'].append((jax.random.uniform(nk(), (G, H, W)) > 0.5).astype(jnp.float32))
            t['sem_masks'].append((jax.random.uniform(nk(), (H, W)) > 0.5).astype(jnp.float32))
            t['ctr_points'].append(jax.random.uniform(nk(), (G, P, 2), jnp.float32))
            t['valid_masks'].append(valid)
            t['curve_points'].append(jax.random.uniform(nk(), (G, C, 2), jnp.float32))
        targets.append(t)

    criterion_conf = {
        'loss_weight': {'ctr_loss': 1.0, 'end_loss': 0.5, 'msk_loss': 2.0,
                        'curve_loss': 1.0, 'recovery_loss': 0.5,
                        'obj_loss': 1.0, 'sem_loss': 1.0},
        'ins_decoder': {'weight': [0.5, 1.0]},
        'bev_decoder': {'weight': [0.5, 1.0], 'sem_mask_loss': {'ce_weight': 1.0}},
        'class_weights': [1.0, 1.5, 1.0],
    }

    criterion = SetCriterionPallas(criterion_conf, num_degree=num_degree, no_object_coe=1.0)
    total_loss, loss_dict = criterion(outputs, targets)
    jax.block_until_ready(total_loss)
    print("KERNEL_OK")
</pallas_src>

<mosaic_0001>
module attributes {stable_mosaic.version = 11 : i64} {
  func.func @_instance_losses_kernel(%arg0: i32, %arg1: i32, %arg2: memref<6xi32, #tpu.memory_space<smem>>, %arg3: memref<6xi32, #tpu.memory_space<smem>>, %arg4: memref<1x8x256xf32, #tpu.memory_space<vmem>>, %arg5: memref<1x8x256xf32, #tpu.memory_space<vmem>>, %arg6: memref<2x256xf32, #tpu.memory_space<vmem>>, %arg7: memref<1x8x256xf32, #tpu.memory_space<vmem>>, %arg8: memref<1x1x128xf32, #tpu.memory_space<vmem>>, %arg9: memref<8x128xf32, #tpu.memory_space<vmem>>) attributes {dimension_semantics = [#tpu.dimension_semantics<parallel>, #tpu.dimension_semantics<arbitrary>], iteration_bounds = array<i64: 6, 1>, scalar_prefetch = 2 : i64, scratch_operands = 1 : i64, tpu.core_type = #tpu.core_type<tc>, window_params = [{transform_indices = @transform_0, window_bounds = array<i64: 1, 8, 256>}, {transform_indices = @transform_1, window_bounds = array<i64: 1, 8, 256>}, {transform_indices = @transform_2, window_bounds = array<i64: 2, 256>}, {transform_indices = @transform_3, window_bounds = array<i64: 1, 8, 256>}, {transform_indices = @transform_4, window_bounds = array<i64: 1, 1, 128>}]} {
    %c0_i32 = arith.constant 0 : i32
    %0 = arith.cmpi eq, %arg1, %c0_i32 : i32
    %1 = arith.extui %0 : i1 to i32
    %c0_i32_0 = arith.constant 0 : i32
    %2 = arith.cmpi ne, %1, %c0_i32_0 : i32
    scf.if %2 {
      %cst_31 = arith.constant 0.000000e+00 : f32
      %338 = vector.broadcast %cst_31 : f32 to vector<8x128xf32>
      %c0_32 = arith.constant 0 : index
      %c0_33 = arith.constant 0 : index
      %339 = vector.load %arg9[%c0_32, %c0_33] : memref<8x128xf32, #tpu.memory_space<vmem>>, vector<8x128xf32>
      tpu.vector_store %arg9[%c0_32, %c0_33], %338 {strides = array<i32>} : memref<8x128xf32, #tpu.memory_space<vmem>>, vector<8x128xf32>,
    } else {
    }
    %3 = tpu.iota {dimensions = array<i32: 1>} : vector<1x128xi32>
    %c0 = arith.constant 0 : index
    %c0_1 = arith.constant 0 : index
    %c0_2 = arith.constant 0 : index
    %4 = vector.load %arg4[%c0, %c0_1, %c0_2] : memref<1x8x256xf32, #tpu.memory_space<vmem>>, vector<1x8x256xf32>
    %5 = vector.shape_cast %4 : vector<1x8x256xf32> to vector<8x256xf32>
    %c0_3 = arith.constant 0 : index
    %c0_4 = arith.constant 0 : index
    %c0_5 = arith.constant 0 : index
    %6 = vector.load %arg5[%c0_3, %c0_4, %c0_5] : memref<1x8x256xf32, #tpu.memory_space<vmem>>, vector<1x8x256xf32>
    %7 = vector.shape_cast %6 : vector<1x8x256xf32> to vector<8x256xf32>
    %8 = math.absf %5 : vector<8x256xf32>
    %cst = arith.constant 0.000000e+00 : f32
    %9 = vector.broadcast %cst : f32 to vector<8x256xf32>
    %10 = arith.subf %9, %8 : vector<8x256xf32>
    %11 = math.exp %10 : vector<8x256xf32>
    %cst_6 = arith.constant 0.000000e+00 : f32
    %12 = vector.broadcast %cst_6 : f32 to vector<8x256xf32>
    %13 = arith.maximumf %5, %12 : vector<8x256xf32>
    %14 = arith.mulf %5, %7 : vector<8x256xf32>
    %15 = arith.subf %13, %14 : vector<8x256xf32>
    %cst_7 = arith.constant 1.000000e+00 : f32
    %16 = vector.broadcast %cst_7 : f32 to vector<8x256xf32>
    %17 = arith.addf %16, %11 : vector<8x256xf32>
    %18 = math.log %17 : vector<8x256xf32>
    %19 = arith.addf %15, %18 : vector<8x256xf32>
    %cst_8 = arith.constant 1.000000e+00 : f32
    %20 = vector.broadcast %cst_8 : f32 to vector<8x256xf32>
    %21 = arith.addf %20, %11 : vector<8x256xf32>
    %22 = tpu.reciprocal %21 {approx = true} : vector<8x256xf32> -> vector<8x256xf32>
    %cst_9 = arith.constant 0.000000e+00 : f32
    %23 = vector.broadcast %cst_9 : f32 to vector<8x256xf32>
    %24 = arith.cmpf oge, %5, %23 : vector<8x256xf32>
    %25 = arith.mulf %11, %22 : vector<8x256xf32>
    %26 = arith.select %24, %22, %25 : vector<8x256xi1>, vector<8x256xf32>
    %cst_10 = arith.constant dense<0.000000e+00> : vector<8xf32>
    %27 = vector.multi_reduction <add>, %19, %cst_10 [1] : vector<8x256xf32> to vector<8xf32>
    %28 = vector.shape_cast %27 : vector<8xf32> to vector<8x1xf32>
    %29 = arith.mulf %26, %7 : vector<8x256xf32>
    %cst_11 = arith.constant dense<0.000000e+00> : vector<8xf32>
    %30 = vector.multi_reduction <add>, %29, %cst_11 [1] : vector<8x256xf32> to vector<8xf32>
    %31 = vector.shape_cast %30 : vector<8xf32> to vector<8x1xf32>
    %cst_12 = arith.constant dense<0.000000e+00> : vector<8xf32>
    %32 = vector.multi_reduction <add>, %26, %cst_12 [1] : vector<8x256xf32> to vector<8xf32>
    %33 = vector.shape_cast %32 : vector<8xf32> to vector<8x1xf32>
    %cst_13 = arith.constant dense<0.000000e+00> : vector<8xf32>
    %34 = vector.multi_reduction <add>, %7, %cst_13 [1] : vector<8x256xf32> to vector<8xf32>
    %35 = vector.shape_cast %34 : vector<8xf32> to vector<8x1xf32>
    %c0_14 = arith.constant 0 : index
    %c0_15 = arith.constant 0 : index
    %c0_16 = arith.constant 0 : index
    %36 = vector.load %arg7[%c0_14, %c0_15, %c0_16] : memref<1x8x256xf32, #tpu.memory_space<vmem>>, vector<1x8x256xf32>
    %37 = vector.shape_cast %36 : vector<1x8x256xf32> to vector<8x256xf32>
    %38 = vector.extract_strided_slice %37 {offsets = [0, 128], sizes = [8, 20], strides = [1, 1]} : vector<8x256xf32> to vector<8x20xf32>
    %39 = vector.extract_strided_slice %37 {offsets = [0, 148], sizes = [8, 20], strides = [1, 1]} : vector<8x256xf32> to vector<8x20xf32>
    %c0_17 = arith.constant 0 : index
    %c0_18 = arith.constant 0 : index
    %40 = vector.load %arg6[%c0_17, %c0_18] : memref<2x256xf32, #tpu.memory_space<vmem>>, vector<1x256xf32>
    %c1 = arith.constant 1 : index
    %c0_19 = arith.constant 0 : index
    %41 = vector.load %arg6[%c1, %c0_19] : memref<2x256xf32, #tpu.memory_space<vmem>>, vector<1x256xf32>
    %42 = vector.extract_strided_slice %38 {offsets = [0, 0], sizes = [8, 1], strides = [1, 1]} : vector<8x20xf32> to vector<8x1xf32>
    %43 = vector.broadcast %40 : vector<1x256xf32> to vector<8x256xf32>
    %44 = vector.broadcast %42 : vector<8x1xf32> to vector<8x256xf32>
    %45 = arith.subf %43, %44 : vector<8x256xf32>
    %46 = vector.extract_strided_slice %39 {offsets = [0, 0], sizes = [8, 1], strides = [1, 1]} : vector<8x20xf32> to vector<8x1xf32>
    %47 = vector.broadcast %41 : vector<1x256xf32> to vector<8x256xf32>
    %48 = vector.broadcast %46 : vector<8x1xf32> to vector<8x256xf32>
    %49 = arith.subf %47, %48 : vector<8x256xf32>
    %50 = arith.mulf %45, %45 : vector<8x256xf32>
    %51 = arith.mulf %49, %49 : vector<8x256xf32>
    %52 = arith.addf %50, %51 : vector<8x256xf32>
    %53 = vector.extract_strided_slice %38 {offsets = [0, 1], sizes = [8, 1], strides = [1, 1]} : vector<8x20xf32> to vector<8x1xf32>
    %54 = vector.broadcast %40 : vector<1x256xf32> to vector<8x256xf32>
    %55 = vector.broadcast %53 : vector<8x1xf32> to vector<8x256xf32>
    %56 = arith.subf %54, %55 : vector<8x256xf32>
    %57 = vector.extract_strided_slice %39 {offsets = [0, 1], sizes = [8, 1], strides = [1, 1]} : vector<8x20xf32> to vector<8x1xf32>
    %58 = vector.broadcast %41 : vector<1x256xf32> to vector<8x256xf32>
    %59 = vector.broadcast %57 : vector<8x1xf32> to vector<8x256xf32>
    %60 = arith.subf %58, %59 : vector<8x256xf32>
    %61 = arith.mulf %56, %56 : vector<8x256xf32>
    %62 = arith.mulf %60, %60 : vector<8x256xf32>
    %63 = arith.addf %61, %62 : vector<8x256xf32>
    %64 = arith.minimumf %52, %63 : vector<8x256xf32>
    %65 = vector.extract_strided_slice %38 {offsets = [0, 2], sizes = [8, 1], strides = [1, 1]} : vector<8x20xf32> to vector<8x1xf32>
    %66 = vector.broadcast %40 : vector<1x256xf32> to vector<8x256xf32>
    %67 = vector.broadcast %65 : vector<8x1xf32> to vector<8x256xf32>
    %68 = arith.subf %66, %67 : vector<8x256xf32>
    %69 = vector.extract_strided_slice %39 {offsets = [0, 2], sizes = [8, 1], strides = [1, 1]} : vector<8x20xf32> to vector<8x1xf32>
    %70 = vector.broadcast %41 : vector<1x256xf32> to vector<8x256xf32>
    %71 = vector.broadcast %69 : vector<8x1xf32> to vector<8x256xf32>
    %72 = arith.subf %70, %71 : vector<8x256xf32>
    %73 = arith.mulf %68, %68 : vector<8x256xf32>
    %74 = arith.mulf %72, %72 : vector<8x256xf32>
    %75 = arith.addf %73, %74 : vector<8x256xf32>
    %76 = arith.minimumf %64, %75 : vector<8x256xf32>
    %77 = vector.extract_strided_slice %38 {offsets = [0, 3], sizes = [8, 1], strides = [1, 1]} : vector<8x20xf32> to vector<8x1xf32>
    %78 = vector.broadcast %40 : vector<1x256xf32> to vector<8x256xf32>
    %79 = vector.broadcast %77 : vector<8x1xf32> to vector<8x256xf32>
    %80 = arith.subf %78, %79 : vector<8x256xf32>
    %81 = vector.extract_strided_slice %39 {offsets = [0, 3], sizes = [8, 1], strides = [1, 1]} : vector<8x20xf32> to vector<8x1xf32>
    %82 = vector.broadcast %41 : vector<1x256xf32> to vector<8x256xf32>
    %83 = vector.broadcast %81 : vector<8x1xf32> to vector<8x256xf32>
    %84 = arith.subf %82, %83 : vector<8x256xf32>
    %85 = arith.mulf %80, %80 : vector<8x256xf32>
    %86 = arith.mulf %84, %84 : vector<8x256xf32>
    %87 = arith.addf %85, %86 : vector<8x256xf32>
    %88 = arith.minimumf %76, %87 : vector<8x256xf32>
    %89 = vector.extract_strided_slice %38 {offsets = [0, 4], sizes = [8, 1], strides = [1, 1]} : vector<8x20xf32> to vector<8x1xf32>
    %90 = vector.broadcast %40 : vector<1x256xf32> to vector<8x256xf32>
    %91 = vector.broadcast %89 : vector<8x1xf32> to vector<8x256xf32>
    %92 = arith.subf %90, %91 : vector<8x256xf32>
    %93 = vector.extract_strided_slice %39 {offsets = [0, 4], sizes = [8, 1], strides = [1, 1]} : vector<8x20xf32> to vector<8x1xf32>
    %94 = vector.broadcast %41 : vector<1x256xf32> to vector<8x256xf32>
    %95 = vector.broadcast %93 : vector<8x1xf32> to vector<8x256xf32>
    %96 = arith.subf %94, %95 : vector<8x256xf32>
    %97 = arith.mulf %92, %92 : vector<8x256xf32>
    %98 = arith.mulf %96, %96 : vector<8x256xf32>
    %99 = arith.addf %97, %98 : vector<8x256xf32>
    %100 = arith.minimumf %88, %99 : vector<8x256xf32>
    %101 = vector.extract_strided_slice %38 {offsets = [0, 5], sizes = [8, 1], strides = [1, 1]} : vector<8x20xf32> to vector<8x1xf32>
    %102 = vector.broadcast %40 : vector<1x256xf32> to vector<8x256xf32>
    %103 = vector.broadcast %101 : vector<8x1xf32> to vector<8x256xf32>
    %104 = arith.subf %102, %103 : vector<8x256xf32>
    %105 = vector.extract_strided_slice %39 {offsets = [0, 5], sizes = [8, 1], strides = [1, 1]} : vector<8x20xf32> to vector<8x1xf32>
    %106 = vector.broadcast %41 : vector<1x256xf32> to vector<8x256xf32>
    %107 = vector.broadcast %105 : vector<8x1xf32> to vector<8x256xf32>
    %108 = arith.subf %106, %107 : vector<8x256xf32>
    %109 = arith.mulf %104, %104 : vector<8x256xf32>
    %110 = arith.mulf %108, %108 : vector<8x256xf32>
    %111 = arith.addf %109, %110 : vector<8x256xf32>
    %112 = arith.minimumf %100, %111 : vector<8x256xf32>
    %113 = vector.extract_strided_slice %38 {offsets = [0, 6], sizes = [8, 1], strides = [1, 1]} : vector<8x20xf32> to vector<8x1xf32>
    %114 = vector.broadcast %40 : vector<1x256xf32> to vector<8x256xf32>
    %115 = vector.broadcast %113 : vector<8x1xf32> to vector<8x256xf32>
    %116 = arith.subf %114, %115 : vector<8x256xf32>
    %117 = vector.extract_strided_slice %39 {offsets = [0, 6], sizes = [8, 1], strides = [1, 1]} : vector<8x20xf32> to vector<8x1xf32>
    %118 = vector.broadcast %41 : vector<1x256xf32> to vector<8x256xf32>
    %119 = vector.broadcast %117 : vector<8x1xf32> to vector<8x256xf32>
    %120 = arith.subf %118, %119 : vector<8x256xf32>
    %121 = arith.mulf %116, %116 : vector<8x256xf32>
    %122 = arith.mulf %120, %120 : vector<8x256xf32>
    %123 = arith.addf %121, %122 : vector<8x256xf32>
    %124 = arith.minimumf %112, %123 : vector<8x256xf32>
    %125 = vector.extract_strided_slice %38 {offsets = [0, 7], sizes = [8, 1], strides = [1, 1]} : vector<8x20xf32> to vector<8x1xf32>
    %126 = vector.broadcast %40 : vector<1x256xf32> to vector<8x256xf32>
    %127 = vector.broadcast %125 : vector<8x1xf32> to vector<8x256xf32>
    %128 = arith.subf %126, %127 : vector<8x256xf32>
    %129 = vector.extract_strided_slice %39 {offsets = [0, 7], sizes = [8, 1], strides = [1, 1]} : vector<8x20xf32> to vector<8x1xf32>
    %130 = vector.broadcast %41 : vector<1x256xf32> to vector<8x256xf32>
    %131 = vector.broadcast %129 : vector<8x1xf32> to vector<8x256xf32>
    %132 = arith.subf %130, %131 : vector<8x256xf32>
    %133 = arith.mulf %128, %128 : vector<8x256xf32>
    %134 = arith.mulf %132, %132 : vector<8x256xf32>
    %135 = arith.addf %133, %134 : vector<8x256xf32>
    %136 = arith.minimumf %124, %135 : vector<8x256xf32>
    %137 = vector.extract_strided_slice %38 {offsets = [0, 8], sizes = [8, 1], strides = [1, 1]} : vector<8x20xf32> to vector<8x1xf32>
    %138 = vector.broadcast %40 : vector<1x256xf32> to vector<8x256xf32>
    %139 = vector.broadcast %137 : vector<8x1xf32> to vector<8x256xf32>
    %140 = arith.subf %138, %139 : vector<8x256xf32>
    %141 = vector.extract_strided_slice %39 {offsets = [0, 8], sizes = [8, 1], strides = [1, 1]} : vector<8x20xf32> to vector<8x1xf32>
    %142 = vector.broadcast %41 : vector<1x256xf32> to vector<8x256xf32>
    %143 = vector.broadcast %141 : vector<8x1xf32> to vector<8x256xf32>
    %144 = arith.subf %142, %143 : vector<8x256xf32>
    %145 = arith.mulf %140, %140 : vector<8x256xf32>
    %146 = arith.mulf %144, %144 : vector<8x256xf32>
    %147 = arith.addf %145, %146 : vector<8x256xf32>
    %148 = arith.minimumf %136, %147 : vector<8x256xf32>
    %149 = vector.extract_strided_slice %38 {offsets = [0, 9], sizes = [8, 1], strides = [1, 1]} : vector<8x20xf32> to vector<8x1xf32>
    %150 = vector.broadcast %40 : vector<1x256xf32> to vector<8x256xf32>
    %151 = vector.broadcast %149 : vector<8x1xf32> to vector<8x256xf32>
    %152 = arith.subf %150, %151 : vector<8x256xf32>
    %153 = vector.extract_strided_slice %39 {offsets = [0, 9], sizes = [8, 1], strides = [1, 1]} : vector<8x20xf32> to vector<8x1xf32>
    %154 = vector.broadcast %41 : vector<1x256xf32> to vector<8x256xf32>
    %155 = vector.broadcast %153 : vector<8x1xf32> to vector<8x256xf32>
    %156 = arith.subf %154, %155 : vector<8x256xf32>
    %157 = arith.mulf %152, %152 : vector<8x256xf32>
    %158 = arith.mulf %156, %156 : vector<8x256xf32>
    %159 = arith.addf %157, %158 : vector<8x256xf32>
    %160 = arith.minimumf %148, %159 : vector<8x256xf32>
    %161 = vector.extract_strided_slice %38 {offsets = [0, 10], sizes = [8, 1], strides = [1, 1]} : vector<8x20xf32> to vector<8x1xf32>
    %162 = vector.broadcast %40 : vector<1x256xf32> to vector<8x256xf32>
    %163 = vector.broadcast %161 : vector<8x1xf32> to vector<8x256xf32>
    %164 = arith.subf %162, %163 : vector<8x256xf32>
    %165 = vector.extract_strided_slice %39 {offsets = [0, 10], sizes = [8, 1], strides = [1, 1]} : vector<8x20xf32> to vector<8x1xf32>
    %166 = vector.broadcast %41 : vector<1x256xf32> to vector<8x256xf32>
    %167 = vector.broadcast %165 : vector<8x1xf32> to vector<8x256xf32>
    %168 = arith.subf %166, %167 : vector<8x256xf32>
    %169 = arith.mulf %164, %164 : vector<8x256xf32>
    %170 = arith.mulf %168, %168 : vector<8x256xf32>
    %171 = arith.addf %169, %170 : vector<8x256xf32>
    %172 = arith.minimumf %160, %171 : vector<8x256xf32>
    %173 = vector.extract_strided_slice %38 {offsets = [0, 11], sizes = [8, 1], strides = [1, 1]} : vector<8x20xf32> to vector<8x1xf32>
    %174 = vector.broadcast %40 : vector<1x256xf32> to vector<8x256xf32>
    %175 = vector.broadcast %173 : vector<8x1xf32> to vector<8x256xf32>
    %176 = arith.subf %174, %175 : vector<8x256xf32>
    %177 = vector.extract_strided_slice %39 {offsets = [0, 11], sizes = [8, 1], strides = [1, 1]} : vector<8x20xf32> to vector<8x1xf32>
    %178 = vector.broadcast %41 : vector<1x256xf32> to vector<8x256xf32>
    %179 = vector.broadcast %177 : vector<8x1xf32> to vector<8x256xf32>
    %180 = arith.subf %178, %179 : vector<8x256xf32>
    %181 = arith.mulf %176, %176 : vector<8x256xf32>
    %182 = arith.mulf %180, %180 : vector<8x256xf32>
    %183 = arith.addf %181, %182 : vector<8x256xf32>
    %184 = arith.minimumf %172, %183 : vector<8x256xf32>
    %185 = vector.extract_strided_slice %38 {offsets = [0, 12], sizes = [8, 1], strides = [1, 1]} : vector<8x20xf32> to vector<8x1xf32>
    %186 = vector.broadcast %40 : vector<1x256xf32> to vector<8x256xf32>
    %187 = vector.broadcast %185 : vector<8x1xf32> to vector<8x256xf32>
    %188 = arith.subf %186, %187 : vector<8x256xf32>
    %189 = vector.extract_strided_slice %39 {offsets = [0, 12], sizes = [8, 1], strides = [1, 1]} : vector<8x20xf32> to vector<8x1xf32>
    %190 = vector.broadcast %41 : vector<1x256xf32> to vector<8x256xf32>
    %191 = vector.broadcast %189 : vector<8x1xf32> to vector<8x256xf32>
    %192 = arith.subf %190, %191 : vector<8x256xf32>
    %193 = arith.mulf %188, %188 : vector<8x256xf32>
    %194 = arith.mulf %192, %192 : vector<8x256xf32>
    %195 = arith.addf %193, %194 : vector<8x256xf32>
    %196 = arith.minimumf %184, %195 : vector<8x256xf32>
    %197 = vector.extract_strided_slice %38 {offsets = [0, 13], sizes = [8, 1], strides = [1, 1]} : vector<8x20xf32> to vector<8x1xf32>
    %198 = vector.broadcast %40 : vector<1x256xf32> to vector<8x256xf32>
    %199 = vector.broadcast %197 : vector<8x1xf32> to vector<8x256xf32>
    %200 = arith.subf %198, %199 : vector<8x256xf32>
    %201 = vector.extract_strided_slice %39 {offsets = [0, 13], sizes = [8, 1], strides = [1, 1]} : vector<8x20xf32> to vector<8x1xf32>
    %202 = vector.broadcast %41 : vector<1x256xf32> to vector<8x256xf32>
    %203 = vector.broadcast %201 : vector<8x1xf32> to vector<8x256xf32>
    %204 = arith.subf %202, %203 : vector<8x256xf32>
    %205 = arith.mulf %200, %200 : vector<8x256xf32>
    %206 = arith.mulf %204, %204 : vector<8x256xf32>
    %207 = arith.addf %205, %206 : vector<8x256xf32>
    %208 = arith.minimumf %196, %207 : vector<8x256xf32>
    %209 = vector.extract_strided_slice %38 {offsets = [0, 14], sizes = [8, 1], strides = [1, 1]} : vector<8x20xf32> to vector<8x1xf32>
    %210 = vector.broadcast %40 : vector<1x256xf32> to vector<8x256xf32>
    %211 = vector.broadcast %209 : vector<8x1xf32> to vector<8x256xf32>
    %212 = arith.subf %210, %211 : vector<8x256xf32>
    %213 = vector.extract_strided_slice %39 {offsets = [0, 14], sizes = [8, 1], strides = [1, 1]} : vector<8x20xf32> to vector<8x1xf32>
    %214 = vector.broadcast %41 : vector<1x256xf32> to vector<8x256xf32>
    %215 = vector.broadcast %213 : vector<8x1xf32> to vector<8x256xf32>
    %216 = arith.subf %214, %215 : vector<8x256xf32>
    %217 = arith.mulf %212, %212 : vector<8x256xf32>
    %218 = arith.mulf %216, %216 : vector<8x256xf32>
    %219 = arith.addf %217, %218 : vector<8x256xf32>
    %220 = arith.minimumf %208, %219 : vector<8x256xf32>
    %221 = vector.extract_strided_slice %38 {offsets = [0, 15], sizes = [8, 1], strides = [1, 1]} : vector<8x20xf32> to vector<8x1xf32>
    %222 = vector.broadcast %40 : vector<1x256xf32> to vector<8x256xf32>
    %223 = vector.broadcast %221 : vector<8x1xf32> to vector<8x256xf32>
    %224 = arith.subf %222, %223 : vector<8x256xf32>
    %225 = vector.extract_strided_slice %39 {offsets = [0, 15], sizes = [8, 1], strides = [1, 1]} : vector<8x20xf32> to vector<8x1xf32>
    %226 = vector.broadcast %41 : vector<1x256xf32> to vector<8x256xf32>
    %227 = vector.broadcast %225 : vector<8x1xf32> to vector<8x256xf32>
    %228 = arith.subf %226, %227 : vector<8x256xf32>
    %229 = arith.mulf %224, %224 : vector<8x256xf32>
    %230 = arith.mulf %228, %228 : vector<8x256xf32>
    %231 = arith.addf %229, %230 : vector<8x256xf32>
    %232 = arith.minimumf %220, %231 : vector<8x256xf32>
    %233 = vector.extract_strided_slice %38 {offsets = [0, 16], sizes = [8, 1], strides = [1, 1]} : vector<8x20xf32> to vector<8x1xf32>
    %234 = vector.broadcast %40 : vector<1x256xf32> to vector<8x256xf32>
    %235 = vector.broadcast %233 : vector<8x1xf32> to vector<8x256xf32>
    %236 = arith.subf %234, %235 : vector<8x256xf32>
    %237 = vector.extract_strided_slice %39 {offsets = [0, 16], sizes = [8, 1], strides = [1, 1]} : vector<8x20xf32> to vector<8x1xf32>
    %238 = vector.broadcast %41 : vector<1x256xf32> to vector<8x256xf32>
    %239 = vector.broadcast %237 : vector<8x1xf32> to vector<8x256xf32>
    %240 = arith.subf %238, %239 : vector<8x256xf32>
    %241 = arith.mulf %236, %236 : vector<8x256xf32>
    %242 = arith.mulf %240, %240 : vector<8x256xf32>
    %243 = arith.addf %241, %242 : vector<8x256xf32>
    %244 = arith.minimumf %232, %243 : vector<8x256xf32>
    %245 = vector.extract_strided_slice %38 {offsets = [0, 17], sizes = [8, 1], strides = [1, 1]} : vector<8x20xf32> to vector<8x1xf32>
    %246 = vector.broadcast %40 : vector<1x256xf32> to vector<8x256xf32>
    %247 = vector.broadcast %245 : vector<8x1xf32> to vector<8x256xf32>
    %248 = arith.subf %246, %247 : vector<8x256xf32>
    %249 = vector.extract_strided_slice %39 {offsets = [0, 17], sizes = [8, 1], strides = [1, 1]} : vector<8x20xf32> to vector<8x1xf32>
    %250 = vector.broadcast %41 : vector<1x256xf32> to vector<8x256xf32>
    %251 = vector.broadcast %249 : vector<8x1xf32> to vector<8x256xf32>
    %252 = arith.subf %250, %251 : vector<8x256xf32>
    %253 = arith.mulf %248, %248 : vector<8x256xf32>
    %254 = arith.mulf %252, %252 : vector<8x256xf32>
    %255 = arith.addf %253, %254 : vector<8x256xf32>
    %256 = arith.minimumf %244, %255 : vector<8x256xf32>
    %257 = vector.extract_strided_slice %38 {offsets = [0, 18], sizes = [8, 1], strides = [1, 1]} : vector<8x20xf32> to vector<8x1xf32>
    %258 = vector.broadcast %40 : vector<1x256xf32> to vector<8x256xf32>
    %259 = vector.broadcast %257 : vector<8x1xf32> to vector<8x256xf32>
    %260 = arith.subf %258, %259 : vector<8x256xf32>
    %261 = vector.extract_strided_slice %39 {offsets = [0, 18], sizes = [8, 1], strides = [1, 1]} : vector<8x20xf32> to vector<8x1xf32>
    %262 = vector.broadcast %41 : vector<1x256xf32> to vector<8x256xf32>
    %263 = vector.broadcast %261 : vector<8x1xf32> to vector<8x256xf32>
    %264 = arith.subf %262, %263 : vector<8x256xf32>
    %265 = arith.mulf %260, %260 : vector<8x256xf32>
    %266 = arith.mulf %264, %264 : vector<8x256xf32>
    %267 = arith.addf %265, %266 : vector<8x256xf32>
    %268 = arith.minimumf %256, %267 : vector<8x256xf32>
    %269 = vector.extract_strided_slice %38 {offsets = [0, 19], sizes = [8, 1], strides = [1, 1]} : vector<8x20xf32> to vector<8x1xf32>
    %270 = vector.broadcast %40 : vector<1x256xf32> to vector<8x256xf32>
    %271 = vector.broadcast %269 : vector<8x1xf32> to vector<8x256xf32>
    %272 = arith.subf %270, %271 : vector<8x256xf32>
    %273 = vector.extract_strided_slice %39 {offsets = [0, 19], sizes = [8, 1], strides = [1, 1]} : vector<8x20xf32> to vector<8x1xf32>
    %274 = vector.broadcast %41 : vector<1x256xf32> to vector<8x256xf32>
    %275 = vector.broadcast %273 : vector<8x1xf32> to vector<8x256xf32>
    %276 = arith.subf %274, %275 : vector<8x256xf32>
    %277 = arith.mulf %272, %272 : vector<8x256xf32>
    %278 = arith.mulf %276, %276 : vector<8x256xf32>
    %279 = arith.addf %277, %278 : vector<8x256xf32>
    %280 = arith.minimumf %268, %279 : vector<8x256xf32>
    %cst_20 = arith.constant -2.000000e+02 : f32
    %281 = vector.broadcast %cst_20 : f32 to vector<8x256xf32>
    %282 = arith.mulf %280, %281 : vector<8x256xf32>
    %283 = math.exp %282 : vector<8x256xf32>
    %284 = arith.mulf %283, %7 : vector<8x256xf32>
    %cst_21 = arith.constant dense<0.000000e+00> : vector<8xf32>
    %285 = vector.multi_reduction <add>, %284, %cst_21 [1] : vector<8x256xf32> to vector<8xf32>
    %286 = vector.shape_cast %285 : vector<8xf32> to vector<8x1xf32>
    %cst_22 = arith.constant dense<0.000000e+00> : vector<8xf32>
    %287 = vector.multi_reduction <add>, %283, %cst_22 [1] : vector<8x256xf32> to vector<8xf32>
    %288 = vector.shape_cast %287 : vector<8xf32> to vector<8x1xf32>
    %cst_23 = arith.constant 0.000000e+00 : f32
    %289 = vector.broadcast %cst_23 : f32 to vector<8x128xf32>
    %c0_i32_24 = arith.constant 0 : i32
    %290 = vector.broadcast %c0_i32_24 : i32 to vector<1x128xi32>
    %291 = arith.cmpi eq, %3, %290 : vector<1x128xi32>
    %292 = vector.shape_cast %291 : vector<1x128xi1> to vector<1x128xi1>
    %293 = vector.broadcast %292 : vector<1x128xi1> to vector<8x128xi1>
    %294 = vector.shape_cast %28 : vector<8x1xf32> to vector<8x1xf32>
    %295 = vector.broadcast %294 : vector<8x1xf32> to vector<8x128xf32>
    %296 = arith.select %293, %295, %289 : vector<8x128xi1>, vector<8x128xf32>
    %c1_i32 = arith.constant 1 : i32
    %297 = vector.broadcast %c1_i32 : i32 to vector<1x128xi32>
    %298 = arith.cmpi eq, %3, %297 : vector<1x128xi32>
    %299 = vector.shape_cast %298 : vector<1x128xi1> to vector<1x128xi1>
    %300 = vector.broadcast %299 : vector<1x128xi1> to vector<8x128xi1>
    %301 = vector.shape_cast %31 : vector<8x1xf32> to vector<8x1xf32>
    %302 = vector.broadcast %301 : vector<8x1xf32> to vector<8x128xf32>
    %303 = arith.select %300, %302, %296 : vector<8x128xi1>, vector<8x128xf32>
    %c2_i32 = arith.constant 2 : i32
    %304 = vector.broadcast %c2_i32 : i32 to vector<1x128xi32>
    %305 = arith.cmpi eq, %3, %304 : vector<1x128xi32>
    %306 = vector.shape_cast %305 : vector<1x128xi1> to vector<1x128xi1>
    %307 = vector.broadcast %306 : vector<1x128xi1> to vector<8x128xi1>
    %308 = vector.shape_cast %33 : vector<8x1xf32> to vector<8x1xf32>
    %309 = vector.broadcast %308 : vector<8x1xf32> to vector<8x128xf32>
    %310 = arith.select %307, %309, %303 : vector<8x128xi1>, vector<8x128xf32>
    %c3_i32 = arith.constant 3 : i32
    %311 = vector.broadcast %c3_i32 : i32 to vector<1x128xi32>
    %312 = arith.cmpi eq, %3, %311 : vector<1x128xi32>
    %313 = vector.shape_cast %312 : vector<1x128xi1> to vector<1x128xi1>
    %314 = vector.broadcast %313 : vector<1x128xi1> to vector<8x128xi1>
    %315 = vector.shape_cast %35 : vector<8x1xf32> to vector<8x1xf32>
    %316 = vector.broadcast %315 : vector<8x1xf32> to vector<8x128xf32>
    %317 = arith.select %314, %316, %310 : vector<8x128xi1>, vector<8x128xf32>
    %c4_i32 = arith.constant 4 : i32
    %318 = vector.broadcast %c4_i32 : i32 to vector<1x128xi32>
    %319 = arith.cmpi eq, %3, %318 : vector<1x128xi32>
    %320 = vector.shape_cast %319 : vector<1x128xi1> to vector<1x128xi1>
    %321 = vector.broadcast %320 : vector<1x128xi1> to vector<8x128xi1>
    %322 = vector.shape_cast %286 : vector<8x1xf32> to vector<8x1xf32>
    %323 = vector.broadcast %322 : vector<8x1xf32> to vector<8x128xf32>
    %324 = arith.select %321, %323, %317 : vector<8x128xi1>, vector<8x128xf32>
    %c5_i32 = arith.constant 5 : i32
    %325 = vector.broadcast %c5_i32 : i32 to vector<1x128xi32>
    %326 = arith.cmpi eq, %3, %325 : vector<1x128xi32>
    %327 = vector.shape_cast %326 : vector<1x128xi1> to vector<1x128xi1>
    %328 = vector.broadcast %327 : vector<1x128xi1> to vector<8x128xi1>
    %329 = vector.shape_cast %288 : vector<8x1xf32> to vector<8x1xf32>
    %330 = vector.broadcast %329 : vector<8x1xf32> to vector<8x128xf32>
    %331 = arith.select %328, %330, %324 : vector<8x128xi1>, vector<8x128xf32>
    %c0_25 = arith.constant 0 : index
    %c0_26 = arith.constant 0 : index
    %332 = vector.load %arg9[%c0_25, %c0_26] : memref<8x128xf32, #tpu.memory_space<vmem>>, vector<8x128xf32>
    %333 = arith.addf %332, %331 : vector<8x128xf32>
    %c0_27 = arith.constant 0 : index
    %c0_28 = arith.constant 0 : index
    %334 = vector.load %arg9[%c0_27, %c0_28] : memref<8x128xf32, #tpu.memory_space<vmem>>, vector<8x128xf32>
    tpu.vector_store %arg9[%c0_27, %c0_28], %333 {strides = array<i32>} : memref<8x128xf32, #tpu.memory_space<vmem>>, vector<8x128xf32>,
    %c0_i32_29 = arith.constant 0 : i32
    %335 = arith.cmpi eq, %arg1, %c0_i32_29 : i32
    %336 = arith.extui %335 : i1 to i32
    %c0_i32_30 = arith.constant 0 : i32
    %337 = arith.cmpi ne, %336, %c0_i32_30 : i32
    scf.if %337 {
      %c0_31 = arith.constant 0 : index
      %c0_32 = arith.constant 0 : index
      %338 = vector.load %arg9[%c0_31, %c0_32] : memref<8x128xf32, #tpu.memory_space<vmem>>, vector<8x128xf32>
      %339 = vector.extract_strided_slice %338 {offsets = [0, 0], sizes = [8, 1], strides = [1, 1]} : vector<8x128xf32> to vector<8x1xf32>
      %340 = vector.extract_strided_slice %338 {offsets = [0, 1], sizes = [8, 1], strides = [1, 1]} : vector<8x128xf32> to vector<8x1xf32>
      %341 = vector.extract_strided_slice %338 {offsets = [0, 2], sizes = [8, 1], strides = [1, 1]} : vector<8x128xf32> to vector<8x1xf32>
      %342 = vector.extract_strided_slice %338 {offsets = [0, 3], sizes = [8, 1], strides = [1, 1]} : vector<8x128xf32> to vector<8x1xf32>
      %343 = vector.extract_strided_slice %338 {offsets = [0, 4], sizes = [8, 1], strides = [1, 1]} : vector<8x128xf32> to vector<8x1xf32>
      %344 = vector.extract_strided_slice %338 {offsets = [0, 5], sizes = [8, 1], strides = [1, 1]} : vector<8x128xf32> to vector<8x1xf32>
      %345 = arith.index_cast %arg0 : i32 to index
      %346 = memref.load %arg3[%345] : memref<6xi32, #tpu.memory_space<smem>>
      %347 = tpu.iota {dimensions = array<i32: 0>} : vector<8x1xi32>
      %348 = vector.broadcast %346 : i32 to vector<8x1xi32>
      %349 = arith.cmpi slt, %347, %348 : vector<8x1xi32>
      %350 = arith.extui %349 : vector<8x1xi1> to vector<8x1xi32>
      %351 = arith.sitofp %350 : vector<8x1xi32> to vector<8x1xf32>
      %cst_33 = arith.constant 3.906250e-03 : f32
      %352 = vector.broadcast %cst_33 : f32 to vector<8x1xf32>
      %353 = arith.mulf %339, %352 : vector<8x1xf32>
      %cst_34 = arith.constant 2.000000e+00 : f32
      %354 = vector.broadcast %cst_34 : f32 to vector<8x1xf32>
      %355 = arith.mulf %354, %340 : vector<8x1xf32>
      %cst_35 = arith.constant 1.000000e+00 : f32
      %356 = vector.broadcast %cst_35 : f32 to vector<8x1xf32>
      %357 = arith.addf %355, %356 : vector<8x1xf32>
      %358 = arith.addf %341, %342 : vector<8x1xf32>
      %cst_36 = arith.constant 1.000000e+00 : f32
      %359 = vector.broadcast %cst_36 : f32 to vector<8x1xf32>
      %360 = arith.addf %358, %359 : vector<8x1xf32>
      %361 = arith.divf %357, %360 : vector<8x1xf32>
      %cst_37 = arith.constant 1.000000e+00 : f32
      %362 = vector.broadcast %cst_37 : f32 to vector<8x1xf32>
      %363 = arith.subf %362, %361 : vector<8x1xf32>
      %364 = arith.addf %353, %363 : vector<8x1xf32>
      %365 = arith.mulf %351, %364 : vector<8x1xf32>
      %366 = vector.shape_cast %365 : vector<8x1xf32> to vector<1x8x1xf32>
      %cst_38 = arith.constant dense<0.000000e+00> : vector<1xf32>
      %367 = vector.multi_reduction <add>, %366, %cst_38 [1, 2] : vector<1x8x1xf32> to vector<1xf32>
      %368 = vector.shape_cast %367 : vector<1xf32> to vector<1x1x1xf32>
      %369 = vector.extract %368[0, 0, 0] : f32 from vector<1x1x1xf32>
      %370 = vector.broadcast %369 : f32 to vector<1x1xf32>
      %cst_39 = arith.constant 2.000000e+00 : f32
      %371 = vector.broadcast %cst_39 : f32 to vector<8x1xf32>
      %372 = arith.mulf %371, %343 : vector<8x1xf32>
      %cst_40 = arith.constant 1.000000e+00 : f32
      %373 = vector.broadcast %cst_40 : f32 to vector<8x1xf32>
      %374 = arith.addf %372, %373 : vector<8x1xf32>
      %375 = arith.addf %344, %342 : vector<8x1xf32>
      %cst_41 = arith.constant 1.000000e+00 : f32
      %376 = vector.broadcast %cst_41 : f32 to vector<8x1xf32>
      %377 = arith.addf %375, %376 : vector<8x1xf32>
      %378 = arith.divf %374, %377 : vector<8x1xf32>
      %cst_42 = arith.constant 1.000000e+00 : f32
      %379 = vector.broadcast %cst_42 : f32 to vector<8x1xf32>
      %380 = arith.subf %379, %378 : vector<8x1xf32>
      %381 = arith.mulf %351, %380 : vector<8x1xf32>
      %382 = vector.shape_cast %381 : vector<8x1xf32> to vector<1x8x1xf32>
      %cst_43 = arith.constant dense<0.000000e+00> : vector<1xf32>
      %383 = vector.multi_reduction <add>, %382, %cst_43 [1, 2] : vector<1x8x1xf32> to vector<1xf32>
      %384 = vector.shape_cast %383 : vector<1xf32> to vector<1x1x1xf32>
      %385 = vector.extract %384[0, 0, 0] : f32 from vector<1x1x1xf32>
      %386 = vector.broadcast %385 : f32 to vector<1x1xf32>
      %387 = vector.extract_strided_slice %37 {offsets = [0, 0], sizes = [8, 3], strides = [1, 1]} : vector<8x256xf32> to vector<8x3xf32>
      %388 = vector.extract_strided_slice %37 {offsets = [0, 3], sizes = [8, 3], strides = [1, 1]} : vector<8x256xf32> to vector<8x3xf32>
      %389 = vector.extract_strided_slice %37 {offsets = [0, 6], sizes = [8, 1], strides = [1, 1]} : vector<8x256xf32> to vector<8x1xf32>
      %cst_44 = arith.constant dense<0xFF800000> : vector<8xf32>
      %390 = vector.multi_reduction <maximumf>, %387, %cst_44 [1] : vector<8x3xf32> to vector<8xf32>
      %391 = vector.shape_cast %390 : vector<8xf32> to vector<8x1xf32>
      %392 = vector.broadcast %391 : vector<8x1xf32> to vector<8x3xf32>
      %393 = arith.subf %387, %392 : vector<8x3xf32>
      %394 = math.exp %393 : vector<8x3xf32>
      %cst_45 = arith.constant dense<0.000000e+00> : vector<8xf32>
      %395 = vector.multi_reduction <add>, %394, %cst_45 [1] : vector<8x3xf32> to vector<8xf32>
      %396 = vector.shape_cast %395 : vector<8xf32> to vector<8x1xf32>
      %397 = math.log %396 : vector<8x1xf32>
      %398 = arith.addf %391, %397 : vector<8x1xf32>
      %399 = arith.mulf %388, %387 : vector<8x3xf32>
      %cst_46 = arith.constant dense<0.000000e+00> : vector<8xf32>
      %400 = vector.multi_reduction <add>, %399, %cst_46 [1] : vector<8x3xf32> to vector<8xf32>
      %401 = vector.shape_cast %400 : vector<8xf32> to vector<8x1xf32>
      %402 = arith.subf %398, %401 : vector<8x1xf32>
      %403 = arith.mulf %402, %389 : vector<8x1xf32>
      %404 = vector.shape_cast %403 : vector<8x1xf32> to vector<1x8x1xf32>
      %cst_47 = arith.constant dense<0.000000e+00> : vector<1xf32>
      %405 = vector.multi_reduction <add>, %404, %cst_47 [1, 2] : vector<1x8x1xf32> to vector<1xf32>
      %406 = vector.shape_cast %405 : vector<1xf32> to vector<1x1x1xf32>
      %407 = vector.extract %406[0, 0, 0] : f32 from vector<1x1x1xf32>
      %408 = vector.broadcast %407 : f32 to vector<1x1xf32>
      %409 = arith.index_cast %arg0 : i32 to index
      %410 = memref.load %arg2[%409] : memref<6xi32, #tpu.memory_space<smem>>
      %411 = tpu.iota {dimensions = array<i32: 1>} : vector<8x3xi32>
      %412 = vector.broadcast %391 : vector<8x1xf32> to vector<8x3xf32>
      %413 = arith.cmpf oeq, %387, %412 : vector<8x3xf32>
      %c3_i32_48 = arith.constant 3 : i32
      %414 = vector.broadcast %c3_i32_48 : i32 to vector<8x3xi32>
      %415 = arith.select %413, %411, %414 : vector<8x3xi1>, vector<8x3xi32>
      %cst_49 = arith.constant dense<2147483647> : vector<8xi32>
      %416 = vector.multi_reduction <minsi>, %415, %cst_49 [1] : vector<8x3xi32> to vector<8xi32>
      %417 = vector.shape_cast %416 : vector<8xi32> to vector<8x1xi32>
      %c1_i32_50 = arith.constant 1 : i32
      %418 = vector.broadcast %c1_i32_50 : i32 to vector<8x1xi32>
      %419 = arith.addi %417, %418 : vector<8x1xi32>
      %420 = vector.broadcast %410 : i32 to vector<8x1xi32>
      %421 = arith.muli %419, %420 : vector<8x1xi32>
      %c1_i32_51 = arith.constant 1 : i32
      %422 = vector.broadcast %c1_i32_51 : i32 to vector<8x1xi32>
      %423 = arith.addi %421, %422 : vector<8x1xi32>
      %424 = tpu.iota {dimensions = array<i32: 1>} : vector<8x10xi32>
      %425 = vector.broadcast %423 : vector<8x1xi32> to vector<8x10xi32>
      %426 = arith.cmpi slt, %424, %425 : vector<8x10xi32>
      %427 = arith.extui %426 : vector<8x10xi1> to vector<8x10xi32>
      %428 = arith.sitofp %427 : vector<8x10xi32> to vector<8x10xf32>
      %429 = vector.extract_strided_slice %37 {offsets = [0, 7], sizes = [8, 10], strides = [1, 1]} : vector<8x256xf32> to vector<8x10xf32>
      %430 = vector.extract_strided_slice %37 {offsets = [0, 17], sizes = [8, 10], strides = [1, 1]} : vector<8x256xf32> to vector<8x10xf32>
      %431 = vector.extract_strided_slice %37 {offsets = [0, 27], sizes = [8, 10], strides = [1, 1]} : vector<8x256xf32> to vector<8x10xf32>
      %432 = vector.extract_strided_slice %37 {offsets = [0, 37], sizes = [8, 10], strides = [1, 1]} : vector<8x256xf32> to vector<8x10xf32>
      %433 = vector.extract_strided_slice %37 {offsets = [0, 47], sizes = [8, 10], strides = [1, 1]} : vector<8x256xf32> to vector<8x10xf32>
      %434 = arith.mulf %429, %428 : vector<8x10xf32>
      %435 = arith.mulf %431, %433 : vector<8x10xf32>
      %436 = arith.subf %434, %435 : vector<8x10xf32>
      %437 = math.absf %436 : vector<8x10xf32>
      %438 = vector.shape_cast %437 : vector<8x10xf32> to vector<1x8x10xf32>
      %cst_52 = arith.constant dense<0.000000e+00> : vector<1xf32>
      %439 = vector.multi_reduction <add>, %438, %cst_52 [1, 2] : vector<1x8x10xf32> to vector<1xf32>
      %440 = vector.shape_cast %439 : vector<1xf32> to vector<1x1x1xf32>
      %441 = vector.extract %440[0, 0, 0] : f32 from vector<1x1x1xf32>
      %442 = vector.broadcast %441 : f32 to vector<1x1xf32>
      %443 = arith.mulf %430, %428 : vector<8x10xf32>
      %444 = arith.mulf %432, %433 : vector<8x10xf32>
      %445 = arith.subf %443, %444 : vector<8x10xf32>
      %446 = math.absf %445 : vector<8x10xf32>
      %447 = vector.shape_cast %446 : vector<8x10xf32> to vector<1x8x10xf32>
      %cst_53 = arith.constant dense<0.000000e+00> : vector<1xf32>
      %448 = vector.multi_reduction <add>, %447, %cst_53 [1, 2] : vector<1x8x10xf32> to vector<1xf32>
      %449 = vector.shape_cast %448 : vector<1xf32> to vector<1x1x1xf32>
      %450 = vector.extract %449[0, 0, 0] : f32 from vector<1x1x1xf32>
      %451 = vector.broadcast %450 : f32 to vector<1x1xf32>
      %452 = arith.addf %442, %451 : vector<1x1xf32>
      %453 = vector.extract_strided_slice %37 {offsets = [0, 168], sizes = [8, 20], strides = [1, 1]} : vector<8x256xf32> to vector<8x20xf32>
      %454 = vector.extract_strided_slice %37 {offsets = [0, 188], sizes = [8, 20], strides = [1, 1]} : vector<8x256xf32> to vector<8x20xf32>
      %455 = arith.subf %38, %453 : vector<8x20xf32>
      %456 = math.absf %455 : vector<8x20xf32>
      %457 = vector.shape_cast %456 : vector<8x20xf32> to vector<1x8x20xf32>
      %cst_54 = arith.constant dense<0.000000e+00> : vector<1xf32>
      %458 = vector.multi_reduction <add>, %457, %cst_54 [1, 2] : vector<1x8x20xf32> to vector<1xf32>
      %459 = vector.shape_cast %458 : vector<1xf32> to vector<1x1x1xf32>
      %460 = vector.extract %459[0, 0, 0] : f32 from vector<1x1x1xf32>
      %461 = vector.broadcast %460 : f32 to vector<1x1xf32>
      %462 = arith.subf %39, %454 : vector<8x20xf32>
      %463 = math.absf %462 : vector<8x20xf32>
      %464 = vector.shape_cast %463 : vector<8x20xf32> to vector<1x8x20xf32>
      %cst_55 = arith.constant dense<0.000000e+00> : vector<1xf32>
      %465 = vector.multi_reduction <add>, %464, %cst_55 [1, 2] : vector<1x8x20xf32> to vector<1xf32>
      %466 = vector.shape_cast %465 : vector<1xf32> to vector<1x1x1xf32>
      %467 = vector.extract %466[0, 0, 0] : f32 from vector<1x1x1xf32>
      %468 = vector.broadcast %467 : f32 to vector<1x1xf32>
      %469 = arith.addf %461, %468 : vector<1x1xf32>
      %cst_56 = arith.constant 0.000000e+00 : f32
      %470 = vector.broadcast %cst_56 : f32 to vector<1x128xf32>
      %c0_i32_57 = arith.constant 0 : i32
      %471 = vector.broadcast %c0_i32_57 : i32 to vector<1x128xi32>
      %472 = arith.cmpi eq, %3, %471 : vector<1x128xi32>
      %473 = vector.shape_cast %370 : vector<1x1xf32> to vector<1x1xf32>
      %474 = vector.broadcast %473 : vector<1x1xf32> to vector<1x128xf32>
      %475 = arith.select %472, %474, %470 : vector<1x128xi1>, vector<1x128xf32>
      %c1_i32_58 = arith.constant 1 : i32
      %476 = vector.broadcast %c1_i32_58 : i32 to vector<1x128xi32>
      %477 = arith.cmpi eq, %3, %476 : vector<1x128xi32>
      %478 = vector.shape_cast %408 : vector<1x1xf32> to vector<1x1xf32>
      %479 = vector.broadcast %478 : vector<1x1xf32> to vector<1x128xf32>
      %480 = arith.select %477, %479, %475 : vector<1x128xi1>, vector<1x128xf32>
      %c2_i32_59 = arith.constant 2 : i32
      %481 = vector.broadcast %c2_i32_59 : i32 to vector<1x128xi32>
      %482 = arith.cmpi eq, %3, %481 : vector<1x128xi32>
      %483 = vector.shape_cast %452 : vector<1x1xf32> to vector<1x1xf32>
      %484 = vector.broadcast %483 : vector<1x1xf32> to vector<1x128xf32>
      %485 = arith.select %482, %484, %480 : vector<1x128xi1>, vector<1x128xf32>
      %c3_i32_60 = arith.constant 3 : i32
      %486 = vector.broadcast %c3_i32_60 : i32 to vector<1x128xi32>
      %487 = arith.cmpi eq, %3, %486 : vector<1x128xi32>
      %488 = vector.shape_cast %469 : vector<1x1xf32> to vector<1x1xf32>
      %489 = vector.broadcast %488 : vector<1x1xf32> to vector<1x128xf32>
      %490 = arith.select %487, %489, %485 : vector<1x128xi1>, vector<1x128xf32>
      %c4_i32_61 = arith.constant 4 : i32
      %491 = vector.broadcast %c4_i32_61 : i32 to vector<1x128xi32>
      %492 = arith.cmpi eq, %3, %491 : vector<1x128xi32>
      %493 = vector.shape_cast %386 : vector<1x1xf32> to vector<1x1xf32>
      %494 = vector.broadcast %493 : vector<1x1xf32> to vector<1x128xf32>
      %495 = arith.select %492, %494, %490 : vector<1x128xi1>, vector<1x128xf32>
      %c0_62 = arith.constant 0 : index
      %c0_63 = arith.constant 0 : index
      %c0_64 = arith.constant 0 : index
      %496 = vector.load %arg8[%c0_62, %c0_63, %c0_64] : memref<1x1x128xf32, #tpu.memory_space<vmem>>, vector<1x1x128xf32>
      %497 = vector.shape_cast %496 : vector<1x1x128xf32> to vector<1x128xf32>
      %498 = vector.shape_cast %495 : vector<1x128xf32> to vector<1x1x128xf32>
      tpu.vector_store %arg8[%c0_62, %c0_63, %c0_64], %498 {strides = array<i32>} : memref<1x1x128xf32, #tpu.memory_space<vmem>>, vector<1x1x128xf32>,
    } else {
    }
    return
  }
  func.func @transform_0(%arg0: i32, %arg1: i32, %arg2: memref<6xi32, #tpu.memory_space<smem>>, %arg3: memref<6xi32, #tpu.memory_space<smem>>) -> (i32, i32, i32) {
    %c0_i32 = arith.constant 0 : i32
    %c0_i32_0 = arith.constant 0 : i32
    return %arg0, %c0_i32, %arg1 : i32, i32, i32
  }
  func.func @transform_1(%arg0: i32, %arg1: i32, %arg2: memref<6xi32, #tpu.memory_space<smem>>, %arg3: memref<6xi32, #tpu.memory_space<smem>>) -> (i32, i32, i32) {
    %c3_i32 = arith.constant 3 : i32
    %c0_i32 = arith.constant 0 : i32
    %0 = arith.cmpi eq, %c3_i32, %c0_i32 : i32
    %c1_i32 = arith.constant 1 : i32
    %1 = arith.select %0, %c1_i32, %c3_i32 : i32
    %2 = arith.remsi %arg0, %1 : i32
    %c0_i32_0 = arith.constant 0 : i32
    %3 = arith.cmpi ne, %2, %c0_i32_0 : i32
    %c0_i32_1 = arith.constant 0 : i32
    %4 = arith.cmpi slt, %2, %c0_i32_1 : i32
    %c0_i32_2 = arith.constant 0 : i32
    %5 = arith.cmpi slt, %1, %c0_i32_2 : i32
    %6 = arith.xori %4, %5 : i1
    %7 = arith.andi %6, %3 : i1
    %8 = arith.addi %2, %1 : i32
    %9 = arith.select %7, %8, %2 : i32
    %c0_i32_3 = arith.constant 0 : i32
    %c0_i32_4 = arith.constant 0 : i32
    return %9, %c0_i32_3, %arg1 : i32, i32, i32
  }
  func.func @transform_2(%arg0: i32, %arg1: i32, %arg2: memref<6xi32, #tpu.memory_space<smem>>, %arg3: memref<6xi32, #tpu.memory_space<smem>>) -> (i32, i32) {
    %c0_i32 = arith.constant 0 : i32
    %c0_i32_0 = arith.constant 0 : i32
    return %c0_i32, %arg1 : i32, i32
  }
  func.func @transform_3(%arg0: i32, %arg1: i32, %arg2: memref<6xi32, #tpu.memory_space<smem>>, %arg3: memref<6xi32, #tpu.memory_space<smem>>) -> (i32, i32, i32) {
    %c0_i32 = arith.constant 0 : i32
    %c0_i32_0 = arith.constant 0 : i32
    %c0_i32_1 = arith.constant 0 : i32
    return %arg0, %c0_i32, %c0_i32_0 : i32, i32, i32
  }
  func.func @transform_4(%arg0: i32, %arg1: i32, %arg2: memref<6xi32, #tpu.memory_space<smem>>, %arg3: memref<6xi32, #tpu.memory_space<smem>>) -> (i32, i32, i32) {
    %c0_i32 = arith.constant 0 : i32
    %c0_i32_0 = arith.constant 0 : i32
    %c0_i32_1 = arith.constant 0 : i32
    return %arg0, %c0_i32, %c0_i32_0 : i32, i32, i32
  }
}

</mosaic_0001>

<llo_original>
// kernel: tpu_custom_call.1
$region0: #{tpu_custom_call.1}
  #allocation0 [shape = 'u32[]', space=smem, size = 0x4, offset = 0x4, fixed_abs, tag = 'smem constant byte address 0x4 - core index']
  #allocation1 [shape = 'u32[144,128]{1,0:T(1,128)}', space=vmem, size = 0x12000, scoped, tag = 'internal scratch']
  #allocation2 [shape = 'f32[8,128]{1,0:T(8,128)}', space=vmem, size = 0x1000, scoped, tag = 'scratch operand']
  #allocation3 [shape = 's32[1]{0}', space=sflag, size = 0x4, scoped, tag = 'scoped memory for tpu_custom_call.1']
  #allocation4 [shape = 'u8[512]{0}', space=smem, size = 0x200, scoped, tag = 'prefetched SMEM operand 0']
  #allocation5 [shape = 'u8[512]{0}', space=smem, size = 0x200, scoped, tag = 'prefetched SMEM operand 1']
  %s0 = inlined_call_operand.hbm [shape: s32[6], index: 0, kind: input, shape index: {}]
  %s1 = inlined_call_operand.vmem [shape: s32[6], index: 1, kind: input, shape index: {}]
  %s2 = inlined_call_operand.hbm [shape: f32[6,8,256], index: 2, kind: input, shape index: {}]
  %s3 = inlined_call_operand.hbm [shape: f32[3,8,256], index: 3, kind: input, shape index: {}]
  %s4 = inlined_call_operand.vmem [shape: f32[2,256], index: 4, kind: input, shape index: {}]
  %s5 = inlined_call_operand.hbm [shape: f32[6,8,256], index: 5, kind: input, shape index: {}]
  %s6 = inlined_call_operand.hbm [shape: f32[6,1,128], index: 6, kind: output, shape index: {}]
  %s7 = sld [smem:[#allocation0]]
  $region69: #{tpu_custom_call.1} parent=0
    _
  %s9 = ssub.s32 1, %s7
  %s10 = scalar_select 0, %s9, %s7
  %12 = dma.hbm_to_smem %s0, 16, [#allocation4], [#allocation3]
  %s13 = sshll.u32 %s1, 4
  %s14 = int_to_ptr.vmem [resolvable:$true] %s13
  %16 = dma.vmem_to_smem %s14, 16, [#allocation5], [#allocation3]
  %17 = dma.done [#allocation3], 32
  %18 = sfence
  $region1: #{tpu_custom_call.1} parent=0
    #allocation6 [shape = 'u8[16384]{0}', space=vmem, size = 0x4000, scoped, tag = 'input window, operand 2']
    #allocation7 [shape = 's32[2]{0}', space=sflag, size = 0x8, scoped, tag = 'scoped memory for tpu_custom_call.1']
    #allocation8 [shape = 's32[2]{0}', space=sflag, size = 0x8, scoped, tag = 'scoped memory for tpu_custom_call.1']
    #allocation9 [shape = 'u8[16384]{0}', space=vmem, size = 0x4000, scoped, tag = 'input window, operand 3']
    #allocation10 [shape = 's32[2]{0}', space=sflag, size = 0x8, scoped, tag = 'scoped memory for tpu_custom_call.1']
    #allocation11 [shape = 'u8[16384]{0}', space=vmem, size = 0x4000, scoped, tag = 'input window, operand 5']
    #allocation12 [shape = 'u8[1024]{0}', space=vmem, size = 0x400, scoped, tag = 'output window, operand 0']
    %19 = vsyncpa [#allocation7], 0
    %s20 = scalar_lea.sflag [#allocation7], 1
    %21 = vsyncpa %s20, 0
    %22 = vsyncpa [#allocation10], 0
    %s23 = scalar_lea.sflag [#allocation10], 1
    %24 = vsyncpa %s23, 0
    %25 = vsyncpa [#allocation8], 0
    %s26 = scalar_lea.sflag [#allocation8], 1
    %27 = vsyncpa %s26, 0
    loop: start=0, step=1, limit=8
    $region2: #{tpu_custom_call.1} parent=1 // loop_pre_header
      _
    $region3: #{tpu_custom_call.1} parent=1 // loop_header
      %s29 = sphi 0, %s33
      %p30 = scmp.ge.s32.totalorder %s29, 8
      %s36 = sphi 0, %s48
      %s37 = sphi 0, %s44
      %s38 = sphi 0, %s36
      %s39 = sphi 0, %s37
      %s40 = sphi 0, %s38
      %s41 = sphi 0, %s39
      %s53 = sphi 0, %s55
      %s56 = sphi 0, %s53
      %s57 = sphi 0, %s56
      %s73 = sphi 0, %s57
      %s107 = sphi 0, %s109
      %s110 = sphi 0, %s107
      %s111 = sphi 0, %s110
      %s127 = sphi 0, %s111
      %s133 = sphi 0, %s135
      %s136 = sphi 0, %s133
      %s137 = sphi 0, %s136
      %s153 = sphi 0, %s137
      %s159 = sphi 0, %s161
      %s162 = sphi 0, %s159
      %s163 = sphi 0, %s162
      %s179 = sphi 0, %s163
      %s185 = sphi 0, %s187
      %s188 = sphi 0, %s185
      %s189 = sphi 0, %s188
      %s205 = sphi 0, %s189
    $region4: #{tpu_custom_call.1} parent=1 // loop_header_branch
      %32 = sbr.rel (%p30) target = $region8
    $region5: #{tpu_custom_call.1} parent=1 // loop_body
      %s34 = ssub.s32 %s29, 1
      %s35 = ssub.s32 %s29, 2
      %s42 = sadd.s32 1, %s37
      %p43 = scmp.ge.s32.totalorder %s42, 1
      %s44 = scalar_select %p43, 0, %s42
      %s45 = sadd.s32 1, %s36
      %s46 = scalar_select %p43, %s45, %s36
      %p47 = scmp.ge.s32.totalorder %s46, 6
      %s48 = scalar_select %p47, 0, %s46
      %s49 = ssub.s32 %s36, %s48
      %s50 = ssub.s32 %s37, %s44
      %s51 = sor.u32 %s49, %s50
      %p52 = scmp.eq.s32.totalorder %s51, 0
      %s54 = sadd.s32 %s53, 1
      %s55 = scalar_select %p52, %s53, %s54
      %p58 = pneg %p52
      %p59 = scmp.eq.s32.totalorder %s29, 5
      %p60 = por %p58, %p59
      %p61 = scmp.ne.s32.totalorder %s53, %s56
      %p62 = scmp.eq.s32.totalorder %s29, 0
      %p63 = por %p61, %p62
      %p64 = scmp.ne.s32.totalorder %s53, %s56
      %p65 = scmp.eq.s32.totalorder %s34, 5
      %p66 = por %p64, %p65
      %p67 = scmp.ne.s32.totalorder %s56, %s57
      %p68 = scmp.eq.s32.totalorder %s34, 0
      %p69 = por %p67, %p68
      %p70 = scmp.ne.s32.totalorder %s56, %s57
      %p71 = scmp.eq.s32.totalorder %s35, 5
      %p72 = por %p70, %p71
      %p74 = scmp.ne.s32.totalorder %s57, %s73
      %p75 = scmp.eq.s32.totalorder %s35, 0
      %p76 = por %p74, %p75
      %p77 = scmp.lt.s32.totalorder %s36, 0
      %s78 = ssub.s32 0, %s36
      %s79 = scalar_select %p77, %s78, %s36
      %s80 = sdiv.u32.pop %s79, 3
      %s81 = srem.u32.pop %s79, 3
      %s82 = ssub.s32 0, %s81
      %s83 = scalar_select %p77, %s82, %s81
      %p84 = scmp.ne.s32.totalorder %s83, 0
      %p85 = scmp.lt.s32.totalorder %s83, 0
      %p86 = pnand %p85, %p84
      %p87 = pneg %p86
      %s88 = sadd.s32 %s83, 3
      %s89 = scalar_select %p87, %s88, %s83
      %p90 = scmp.lt.s32.totalorder %s48, 0
      %s91 = ssub.s32 0, %s48
      %s92 = scalar_select %p90, %s91, %s48
      %s93 = sdiv.u32.pop %s92, 3
      %s94 = srem.u32.pop %s92, 3
      %s95 = ssub.s32 0, %s94
      %s96 = scalar_select %p90, %s95, %s94
      %p97 = scmp.ne.s32.totalorder %s96, 0
      %p98 = scmp.lt.s32.totalorder %s96, 0
      %p99 = pnand %p98, %p97
      %p100 = pneg %p99
      %s101 = sadd.s32 %s96, 3
      %s102 = scalar_select %p100, %s101, %s96
      %s103 = ssub.s32 %s89, %s102
      %s104 = ssub.s32 %s37, %s44
      %s105 = sor.u32 %s103, %s104
      %p106 = scmp.eq.s32.totalorder %s105, 0
      %s108 = sadd.s32 %s107, 1
      %s109 = scalar_select %p106, %s107, %s108
      %p112 = pneg %p106
      %p113 = scmp.eq.s32.totalorder %s29, 5
      %p114 = por %p112, %p113
      %p115 = scmp.ne.s32.totalorder %s107, %s110
      %p116 = scmp.eq.s32.totalorder %s29, 0
      %p117 = por %p115, %p116
      %p118 = scmp.ne.s32.totalorder %s107, %s110
      %p119 = scmp.eq.s32.totalorder %s34, 5
      %p120 = por %p118, %p119
      %p121 = scmp.ne.s32.totalorder %s110, %s111
      %p122 = scmp.eq.s32.totalorder %s34, 0
      %p123 = por %p121, %p122
      %p124 = scmp.ne.s32.totalorder %s110, %s111
      %p125 = scmp.eq.s32.totalorder %s35, 5
      %p126 = por %p124, %p125
      %p128 = scmp.ne.s32.totalorder %s111, %s127
      %p129 = scmp.eq.s32.totalorder %s35, 0
      %p130 = por %p128, %p129
      %s131 = ssub.s32 %s37, %s44
      %p132 = scmp.eq.s32.totalorder %s131, 0
      %s134 = sadd.s32 %s133, 1
      %s135 = scalar_select %p132, %s133, %s134
      %p138 = pneg %p132
      %p139 = scmp.eq.s32.totalorder %s29, 5
      %p140 = por %p138, %p139
      %p141 = scmp.ne.s32.totalorder %s133, %s136
      %p142 = scmp.eq.s32.totalorder %s29, 0
      %p143 = por %p141, %p142
      %p144 = scmp.ne.s32.totalorder %s133, %s136
      %p145 = scmp.eq.s32.totalorder %s34, 5
      %p146 = por %p144, %p145
      %p147 = scmp.ne.s32.totalorder %s136, %s137
      %p148 = scmp.eq.s32.totalorder %s34, 0
      %p149 = por %p147, %p148
      %p150 = scmp.ne.s32.totalorder %s136, %s137
      %p151 = scmp.eq.s32.totalorder %s35, 5
      %p152 = por %p150, %p151
      %p154 = scmp.ne.s32.totalorder %s137, %s153
      %p155 = scmp.eq.s32.totalorder %s35, 0
      %p156 = por %p154, %p155
      %s157 = ssub.s32 %s36, %s48
      %p158 = scmp.eq.s32.totalorder %s157, 0
      %s160 = sadd.s32 %s159, 1
      %s161 = scalar_select %p158, %s159, %s160
      %p164 = pneg %p158
      %p165 = scmp.eq.s32.totalorder %s29, 5
      %p166 = por %p164, %p165
      %p167 = scmp.ne.s32.totalorder %s159, %s162
      %p168 = scmp.eq.s32.totalorder %s29, 0
      %p169 = por %p167, %p168
      %p170 = scmp.ne.s32.totalorder %s159, %s162
      %p171 = scmp.eq.s32.totalorder %s34, 5
      %p172 = por %p170, %p171
      %p173 = scmp.ne.s32.totalorder %s162, %s163
      %p174 = scmp.eq.s32.totalorder %s34, 0
      %p175 = por %p173, %p174
      %p176 = scmp.ne.s32.totalorder %s162, %s163
      %p177 = scmp.eq.s32.totalorder %s35, 5
      %p178 = por %p176, %p177
      %p180 = scmp.ne.s32.totalorder %s163, %s179
      %p181 = scmp.eq.s32.totalorder %s35, 0
      %p182 = por %p180, %p181
      %s183 = ssub.s32 %s36, %s48
      %p184 = scmp.eq.s32.totalorder %s183, 0
      %s186 = sadd.s32 %s185, 1
      %s187 = scalar_select %p184, %s185, %s186
      %p190 = pneg %p184
      %p191 = scmp.eq.s32.totalorder %s29, 5
      %p192 = por %p190, %p191
      %p193 = scmp.ne.s32.totalorder %s185, %s188
      %p194 = scmp.eq.s32.totalorder %s29, 0
      %p195 = por %p193, %p194
      %p196 = scmp.ne.s32.totalorder %s185, %s188
      %p197 = scmp.eq.s32.totalorder %s34, 5
      %p198 = por %p196, %p197
      %p199 = scmp.ne.s32.totalorder %s188, %s189
      %p200 = scmp.eq.s32.totalorder %s34, 0
      %p201 = por %p199, %p200
      %p202 = scmp.ne.s32.totalorder %s188, %s189
      %p203 = scmp.eq.s32.totalorder %s35, 5
      %p204 = por %p202, %p203
      %p206 = scmp.ne.s32.totalorder %s189, %s205
      %p207 = scmp.eq.s32.totalorder %s35, 0
      %p208 = por %p206, %p207
      %p209 = scmp.le.s32.totalorder 1, %s29
      %p210 = scmp.lt.s32.totalorder %s29, 7
      %p211 = pnand %p209, %p210
      %p212 = pneg %p211
      // Predicated region
      $region9: #{tpu_custom_call.1} parent=5 // pred_check
        _
      $region10: #{tpu_custom_call.1} parent=5 // pred_check_branch
        %214 = sbr.rel (%p211) target = $region12
      $region11: #{tpu_custom_call.1} parent=5 // pred_region
        %s215 = ssub.s32 %s29, 1
        // Predicated region
        $region13: #{tpu_custom_call.1} parent=11 // pred_check
          %p216 = pneg %p149
        $region14: #{tpu_custom_call.1} parent=11 // pred_check_branch
          %218 = sbr.rel (%p216) target = $region16
        $region15: #{tpu_custom_call.1} parent=11 // pred_region
          %s219 = smul.u32 2, %s39
          %p220 = scmp.lt.s32.totalorder %s219, 1
          %s221 = scalar_select %p220, %s219, 1
          %s222 = smul.addr %s221, 2
          %s223 = scalar_lea.vmem %s4, %s222
          %s224 = smul.u32 2, %s39
        $region16: #{tpu_custom_call.1} parent=11 // pred_fallthru
          _
      $region12: #{tpu_custom_call.1} parent=5 // pred_fallthru
        _
      %p225 = scmp.lt.s32.totalorder %s29, 6
      // Predicated region
      $region17: #{tpu_custom_call.1} parent=5 // pred_check
        %p226 = pneg %p225
      $region18: #{tpu_custom_call.1} parent=5 // pred_check_branch
        %228 = sbr.rel (%p226) target = $region20
      $region19: #{tpu_custom_call.1} parent=5 // pred_region
        // Predicated region
        $region21: #{tpu_custom_call.1} parent=19 // pred_check
          %p229 = pneg %p63
        $region22: #{tpu_custom_call.1} parent=19 // pred_check_branch
          %231 = sbr.rel (%p229) target = $region24
        $region23: #{tpu_custom_call.1} parent=19 // pred_region
          %s232 = sand.u32 %s53, 1
          %s233 = scalar_lea.sflag [#allocation7], %s232
          %s234 = sand.u32 %s53, 1
          %s235 = smul.addr %s234, 16
          %s236 = scalar_lea.vmem [#allocation6], %s235
          %s237 = smul.u32 2, %s37
          %s239 = ssub.s32 256, 256
          %240 = vsyncadd %s233, %s239
          %s241 = smul.addr %s36, 2
          %s242 = sadd.s32 %s237, %s241
          %s243 = smul.addr %s242, 128
          %s244 = scalar_lea.hbm %s2, %s243
          %s246 = sshll.u32 %s236, 4
          %s247 = int_to_ptr.vmem [resolvable:$true] %s246
          %249 = dma.hbm_to_vmem [thread:$0]  %s244, 256, %s247, %s233
        $region24: #{tpu_custom_call.1} parent=19 // pred_fallthru
          _
        // Predicated region
        $region25: #{tpu_custom_call.1} parent=19 // pred_check
          %p250 = pneg %p117
        $region26: #{tpu_custom_call.1} parent=19 // pred_check_branch
          %252 = sbr.rel (%p250) target = $region28
        $region27: #{tpu_custom_call.1} parent=19 // pred_region
          %s253 = sand.u32 %s29, 1
          %s254 = scalar_lea.sflag [#allocation10], %s253
          %s255 = sand.u32 %s107, 1
          %s256 = smul.addr %s255, 16
          %s257 = scalar_lea.vmem [#allocation9], %s256
          %p258 = scmp.lt.s32.totalorder %s36, 0
          %s259 = ssub.s32 0, %s36
          %s260 = scalar_select %p258, %s259, %s36
          %s261 = sdiv.u32.pop %s260, 3
          %s262 = srem.u32.pop %s260, 3
          %s263 = ssub.s32 0, %s262
          %s264 = scalar_select %p258, %s263, %s262
          %p265 = scmp.ne.s32.totalorder %s264, 0
          %p266 = scmp.lt.s32.totalorder %s264, 0
          %p267 = pnand %p266, %p265
          %p268 = pneg %p267
          %s269 = sadd.s32 %s264, 3
          %s270 = scalar_select %p268, %s269, %s264
          %s271 = smul.u32 2, %s37
          %s273 = ssub.s32 256, 256
          %274 = vsyncadd %s254, %s273
          %s275 = smul.addr %s270, 2
          %s276 = sadd.s32 %s271, %s275
          %s277 = smul.addr %s276, 128
          %s278 = scalar_lea.hbm %s3, %s277
          %s280 = sshll.u32 %s257, 4
          %s281 = int_to_ptr.vmem [resolvable:$true] %s280
          %283 = dma.hbm_to_vmem [thread:$0]  %s278, 256, %s281, %s254
        $region28: #{tpu_custom_call.1} parent=19 // pred_fallthru
          _
        // Predicated region
        $region29: #{tpu_custom_call.1} parent=19 // pred_check
          %p284 = pneg %p169
        $region30: #{tpu_custom_call.1} parent=19 // pred_check_branch
          %286 = sbr.rel (%p284) target = $region32
        $region31: #{tpu_custom_call.1} parent=19 // pred_region
          %s287 = sand.u32 %s29, 1
          %s288 = scalar_lea.sflag [#allocation10], %s287
          %s289 = sand.u32 %s159, 1
          %s290 = smul.addr %s289, 16
          %s291 = scalar_lea.vmem [#allocation11], %s290
          %s293 = ssub.s32 256, 256
          %294 = vsyncadd %s288, %s293
          %s295 = smul.addr %s36, 2
          %s296 = smul.addr %s295, 128
          %s297 = scalar_lea.hbm %s5, %s296
          %s299 = sshll.u32 %s291, 4
          %s300 = int_to_ptr.vmem [resolvable:$true] %s299
          %302 = dma.hbm_to_vmem [thread:$0]  %s297, 256, %s300, %s288
        $region32: #{tpu_custom_call.1} parent=19 // pred_fallthru
          _
      $region20: #{tpu_custom_call.1} parent=5 // pred_fallthru
        _
      %p303 = scmp.le.s32.totalorder 1, %s29
      %p304 = scmp.lt.s32.totalorder %s29, 7
      %p305 = pnand %p303, %p304
      %p306 = pneg %p305
      // Predicated region
      $region33: #{tpu_custom_call.1} parent=5 // pred_check
        _
      $region34: #{tpu_custom_call.1} parent=5 // pred_check_branch
        %308 = sbr.rel (%p305) target = $region36
      $region35: #{tpu_custom_call.1} parent=5 // pred_region
        %s309 = ssub.s32 %s29, 1
        %s310 = sand.u32 %s56, 1
        %s311 = scalar_lea.sflag [#allocation7], %s310
        %s312 = sand.u32 %s56, 1
        %s313 = smul.addr %s312, 16
        %s314 = scalar_lea.vmem [#allocation6], %s313
        // Predicated region
        $region37: #{tpu_custom_call.1} parent=35 // pred_check
          %p315 = pneg %p69
        $region38: #{tpu_custom_call.1} parent=35 // pred_check_branch
          %317 = sbr.rel (%p315) target = $region40
        $region39: #{tpu_custom_call.1} parent=35 // pred_region
          %318 = dma.done %s311, 256
        $region40: #{tpu_custom_call.1} parent=35 // pred_fallthru
          _
        %s319 = sand.u32 %s34, 1
        %s320 = scalar_lea.sflag [#allocation10], %s319
        %s321 = sand.u32 %s110, 1
        %s322 = smul.addr %s321, 16
        %s323 = scalar_lea.vmem [#allocation9], %s322
        // Predicated region
        $region41: #{tpu_custom_call.1} parent=35 // pred_check
          %p324 = pneg %p123
        $region42: #{tpu_custom_call.1} parent=35 // pred_check_branch
          %326 = sbr.rel (%p324) target = $region44
        $region43: #{tpu_custom_call.1} parent=35 // pred_region
          %327 = dma.done %s320, 256
        $region44: #{tpu_custom_call.1} parent=35 // pred_fallthru
          _
        %s328 = sand.u32 %s34, 1
        %s329 = scalar_lea.sflag [#allocation10], %s328
        %s330 = sand.u32 %s162, 1
        %s331 = smul.addr %s330, 16
        %s332 = scalar_lea.vmem [#allocation11], %s331
        // Predicated region
        $region45: #{tpu_custom_call.1} parent=35 // pred_check
          %p333 = pneg %p175
        $region46: #{tpu_custom_call.1} parent=35 // pred_check_branch
          %335 = sbr.rel (%p333) target = $region48
        $region47: #{tpu_custom_call.1} parent=35 // pred_region
          %336 = dma.done %s329, 256
        $region48: #{tpu_custom_call.1} parent=35 // pred_fallthru
          _
        %s337 = sand.u32 %s56, 1
        %s338 = scalar_lea.sflag [#allocation7], %s337
        %s339 = sand.u32 %s56, 1
        %s340 = smul.addr %s339, 16
        %s341 = scalar_lea.vmem [#allocation6], %s340
        %p342 = pneg %p69
        %p343 = pneg %p66
        %s344 = sand.u32 %s34, 1
        %s345 = scalar_lea.sflag [#allocation10], %s344
        %s346 = sand.u32 %s110, 1
        %s347 = smul.addr %s346, 16
        %s348 = scalar_lea.vmem [#allocation9], %s347
        %p349 = pneg %p123
        %p350 = pneg %p120
        %s351 = smul.u32 2, %s39
        %p352 = scmp.lt.s32.totalorder %s351, 1
        %s353 = scalar_select %p352, %s351, 1
        %s354 = smul.addr %s353, 2
        %s355 = scalar_lea.vmem %s4, %s354
        %p356 = pneg %p149
        %p357 = pneg %p146
        %s358 = sand.u32 %s34, 1
        %s359 = scalar_lea.sflag [#allocation10], %s358
        %s360 = sand.u32 %s162, 1
        %s361 = smul.addr %s360, 16
        %s362 = scalar_lea.vmem [#allocation11], %s361
        %p363 = pneg %p175
        %p364 = pneg %p172
        %p365 = pneg %p201
        %p366 = pneg %p198
        %s367 = sand.u32 %s188, 1
        %s368 = scalar_lea.sflag [#allocation8], %s367
        %s369 = sand.u32 %s188, 1
        %s370 = scalar_lea.vmem [#allocation12], %s369
        %s371 = smul.u32 2, %s39
        %p372 = scmp.lt.s32.totalorder %s38, 0
        %s373 = ssub.s32 0, %s38
        %s374 = scalar_select %p372, %s373, %s38
        %s375 = sdiv.u32.pop %s374, 3
        %s376 = srem.u32.pop %s374, 3
        %s377 = ssub.s32 0, %s376
        %s378 = scalar_select %p372, %s377, %s376
        %p379 = scmp.ne.s32.totalorder %s378, 0
        %p380 = scmp.lt.s32.totalorder %s378, 0
        %p381 = pnand %p380, %p379
        %p382 = pneg %p381
        %s383 = sadd.s32 %s378, 3
        %s384 = scalar_select %p382, %s383, %s378
        %s385 = smul.u32 2, %s39
        %s386 = smul.u32 2, %s39
        %p387 = scmp.lt.s32.totalorder %s386, 1
        %s388 = scalar_select %p387, %s386, 1
        %s389 = smul.addr %s388, 2
        %s390 = scalar_lea.vmem %s4, %s389
        %s391 = smul.u32 2, %s39
        %p392 = scmp.eq.s32.totalorder %s39, 0
        // Predicated region
        $region49: #{tpu_custom_call.1} parent=35 // pred_check
          %p393 = pneg %p392
        $region50: #{tpu_custom_call.1} parent=35 // pred_check_branch
          %395 = sbr.rel (%p393) target = $region52
        $region51: #{tpu_custom_call.1} parent=35 // pred_region
          %396 = vst [vmem:[#allocation2] sm:$0xff] 0.0
        $region52: #{tpu_custom_call.1} parent=35 // pred_fallthru
          _
        %v397 = vlaneseq
        %v398 = vand.u32 %v397, 127
        %v399 = vld [vmem:[%s314] sm:$0xff]
        %v400 = vld [vmem:[%s314 + $0x8] sm:$0xff]
        %v401 = vld [vmem:[%s323] sm:$0xff]
        %v402 = vld [vmem:[%s323 + $0x8] sm:$0xff]
        %v403 = vand.u32 2147483647, %v399
        %v404 = vand.u32 2147483647, %v400
        %v405 = vsub.f32 0.0, %v403
        %v406 = vsub.f32 0.0, %v404
        %v407 = vmul.f32 %v405, 1.442695
        %v408 = vpow.pop %v407
        %v409 = vmul.f32 %v406, 1.442695
        %v410 = vpow.pop %v409
        %v411 = vmax.f32 %v399, 0.0
        %v412 = vmax.f32 %v400, 0.0
        %v413 = vmul.f32 %v399, %v401
        %v414 = vmul.f32 %v400, %v402
        %v415 = vsub.f32 %v411, %v413
        %v416 = vsub.f32 %v412, %v414
        %v417 = vadd.f32 %v408, 1.0
        %v418 = vadd.f32 %v410, 1.0
        %v419 = vlog2.pop %v417
        %v420 = vmul.f32 %v419, 0.6931472
        %v421 = vlog2.pop %v418
        %v422 = vmul.f32 %v421, 0.6931472
        %v423 = vadd.f32 %v415, %v420
        %v424 = vadd.f32 %v416, %v422
        %v425 = vrcp.pop %v417
        %v426 = vrcp.pop %v418
        %vm427 = vcmp.ge.f32.partialorder %v399, 0.0
        %vm428 = vcmp.ge.f32.partialorder %v400, 0.0
        %v429 = vmul.f32 %v408, %v425
        %v430 = vmul.f32 %v410, %v426
        %v431 = vsel %vm427, %v425, %v429
        %v432 = vsel %vm428, %v426, %v430
        %v433 = vadd.f32 %v423, %v424
        %434 = vadd.xlane.f32.xlu0 %v433
        %v435 = vpop.xlane.xlu0 %434
        %v436 = vmul.f32 %v431, %v401
        %v437 = vmul.f32 %v432, %v402
        %v438 = vadd.f32 %v436, %v437
        %439 = vadd.xlane.f32.xlu0 %v438
        %v440 = vpop.xlane.xlu0 %439
        %v441 = vadd.f32 %v431, %v432
        %442 = vadd.xlane.f32.xlu0 %v441
        %v443 = vpop.xlane.xlu0 %442
        %v444 = vadd.f32 %v401, %v402
        %445 = vadd.xlane.f32.xlu0 %v444
        %v446 = vpop.xlane.xlu0 %445
        %v447 = vld [vmem:[%s332] sm:$0xff]
        %v448 = vld [vmem:[%s332 + $0x8] sm:$0xff]
        %v449 = vld [vmem:[%s390] ss:$2 sm:$0x3]
        %s450 = scalar_lea.vmem %s390, 1
        %v451 = vld [vmem:[%s450] ss:$2 sm:$0x3]
        %v453 = vlaneseq
        %v454 = vshrl.u32 %v453, 7
        %v455 = vsub.s32 0, %v454
        %v456 = vrot.slane %v449, %v455
        %v457 = vlaneseq
        %v458 = vshrl.u32 %v457, 7
        %v459 = vsub.s32 1, %v458
        %v460 = vrot.slane %v449, %v459
        %464 = vset.pattern.permute.xlu0 0
        %465 = vperm.xlu0 %464, %v448
        %v466 = vpop.permute.xlu0 %465
        %v468 = vsub.f32 %v456, %v466
        %v469 = vsub.f32 %v460, %v466
        %v471 = vlaneseq
        %v472 = vshrl.u32 %v471, 7
        %v473 = vsub.s32 0, %v472
        %v474 = vrot.slane %v451, %v473
        %v475 = vlaneseq
        %v476 = vshrl.u32 %v475, 7
        %v477 = vsub.s32 1, %v476
        %v478 = vrot.slane %v451, %v477
        %481 = vset.pattern.permute.xlu0 20
        %482 = vperm.xlu0 %481, %v448
        %v483 = vpop.permute.xlu0 %482
        %v485 = vsub.f32 %v474, %v483
        %v486 = vsub.f32 %v478, %v483
        %v487 = vmul.f32 %v468, %v468
        %v488 = vmul.f32 %v469, %v469
        %v489 = vmul.f32 %v485, %v485
        %v490 = vmul.f32 %v486, %v486
        %v491 = vadd.f32 %v487, %v489
        %v492 = vadd.f32 %v488, %v490
        %493 = vset.pattern.permute.xlu0 1
        %494 = vperm.xlu0 %493, %v448
        %v495 = vpop.permute.xlu0 %494
        %v497 = vsub.f32 %v456, %v495
        %v498 = vsub.f32 %v460, %v495
        %499 = vset.pattern.permute.xlu0 21
        %500 = vperm.xlu0 %499, %v448
        %v501 = vpop.permute.xlu0 %500
        %v503 = vsub.f32 %v474, %v501
        %v504 = vsub.f32 %v478, %v501
        %v505 = vmul.f32 %v497, %v497
        %v506 = vmul.f32 %v498, %v498
        %v507 = vmul.f32 %v503, %v503
        %v508 = vmul.f32 %v504, %v504
        %v509 = vadd.f32 %v505, %v507
        %v510 = vadd.f32 %v506, %v508
        %v511 = vmin.f32 %v491, %v509
        %v512 = vmin.f32 %v492, %v510
        %513 = vset.pattern.permute.xlu0 2
        %514 = vperm.xlu0 %513, %v448
        %v515 = vpop.permute.xlu0 %514
        %v517 = vsub.f32 %v456, %v515
        %v518 = vsub.f32 %v460, %v515
        %519 = vset.pattern.permute.xlu0 22
        %520 = vperm.xlu0 %519, %v448
        %v521 = vpop.permute.xlu0 %520
        %v523 = vsub.f32 %v474, %v521
        %v524 = vsub.f32 %v478, %v521
        %v525 = vmul.f32 %v517, %v517
        %v526 = vmul.f32 %v518, %v518
        %v527 = vmul.f32 %v523, %v523
        %v528 = vmul.f32 %v524, %v524
        %v529 = vadd.f32 %v525, %v527
        %v530 = vadd.f32 %v526, %v528
        %v531 = vmin.f32 %v511, %v529
        %v532 = vmin.f32 %v512, %v530
        %533 = vset.pattern.permute.xlu0 3
        %534 = vperm.xlu0 %533, %v448
        %v535 = vpop.permute.xlu0 %534
        %v537 = vsub.f32 %v456, %v535
        %v538 = vsub.f32 %v460, %v535
        %539 = vset.pattern.permute.xlu0 23
        %540 = vperm.xlu0 %539, %v448
        %v541 = vpop.permute.xlu0 %540
        %v543 = vsub.f32 %v474, %v541
        %v544 = vsub.f32 %v478, %v541
        %v545 = vmul.f32 %v537, %v537
        %v546 = vmul.f32 %v538, %v538
        %v547 = vmul.f32 %v543, %v543
        %v548 = vmul.f32 %v544, %v544
        %v549 = vadd.f32 %v545, %v547
        %v550 = vadd.f32 %v546, %v548
        %v551 = vmin.f32 %v531, %v549
        %v552 = vmin.f32 %v532, %v550
        %553 = vset.pattern.permute.xlu0 4
        %554 = vperm.xlu0 %553, %v448
        %v555 = vpop.permute.xlu0 %554
        %v557 = vsub.f32 %v456, %v555
        %v558 = vsub.f32 %v460, %v555
        %559 = vset.pattern.permute.xlu0 24
        %560 = vperm.xlu0 %559, %v448
        %v561 = vpop.permute.xlu0 %560
        %v563 = vsub.f32 %v474, %v561
        %v564 = vsub.f32 %v478, %v561
        %v565 = vmul.f32 %v557, %v557
        %v566 = vmul.f32 %v558, %v558
        %v567 = vmul.f32 %v563, %v563
        %v568 = vmul.f32 %v564, %v564
        %v569 = vadd.f32 %v565, %v567
        %v570 = vadd.f32 %v566, %v568
        %v571 = vmin.f32 %v551, %v569
        %v572 = vmin.f32 %v552, %v570
        %573 = vset.pattern.permute.xlu0 5
        %574 = vperm.xlu0 %573, %v448
        %v575 = vpop.permute.xlu0 %574
        %v577 = vsub.f32 %v456, %v575
        %v578 = vsub.f32 %v460, %v575
        %579 = vset.pattern.permute.xlu0 25
        %580 = vperm.xlu0 %579, %v448
        %v581 = vpop.permute.xlu0 %580
        %v583 = vsub.f32 %v474, %v581
        %v584 = vsub.f32 %v478, %v581
        %v585 = vmul.f32 %v577, %v577
        %v586 = vmul.f32 %v578, %v578
        %v587 = vmul.f32 %v583, %v583
        %v588 = vmul.f32 %v584, %v584
        %v589 = vadd.f32 %v585, %v587
        %v590 = vadd.f32 %v586, %v588
        %v591 = vmin.f32 %v571, %v589
        %v592 = vmin.f32 %v572, %v590
        %593 = vset.pattern.permute.xlu0 6
        %594 = vperm.xlu0 %593, %v448
        %v595 = vpop.permute.xlu0 %594
        %v597 = vsub.f32 %v456, %v595
        %v598 = vsub.f32 %v460, %v595
        %599 = vset.pattern.permute.xlu0 26
        %600 = vperm.xlu0 %599, %v448
        %v601 = vpop.permute.xlu0 %600
        %v603 = vsub.f32 %v474, %v601
        %v604 = vsub.f32 %v478, %v601
        %v605 = vmul.f32 %v597, %v597
        %v606 = vmul.f32 %v598, %v598
        %v607 = vmul.f32 %v603, %v603
        %v608 = vmul.f32 %v604, %v604
        %v609 = vadd.f32 %v605, %v607
        %v610 = vadd.f32 %v606, %v608
        %v611 = vmin.f32 %v591, %v609
        %v612 = vmin.f32 %v592, %v610
        %613 = vset.pattern.permute.xlu0 7
        %614 = vperm.xlu0 %613, %v448
        %v615 = vpop.permute.xlu0 %614
        %v617 = vsub.f32 %v456, %v615
        %v618 = vsub.f32 %v460, %v615
        %619 = vset.pattern.permute.xlu0 27
        %620 = vperm.xlu0 %619, %v448
        %v621 = vpop.permute.xlu0 %620
        %v623 = vsub.f32 %v474, %v621
        %v624 = vsub.f32 %v478, %v621
        %v625 = vmul.f32 %v617, %v617
        %v626 = vmul.f32 %v618, %v618
        %v627 = vmul.f32 %v623, %v623
        %v628 = vmul.f32 %v624, %v624
        %v629 = vadd.f32 %v625, %v627
        %v630 = vadd.f32 %v626, %v628
        %v631 = vmin.f32 %v611, %v629
        %v632 = vmin.f32 %v612, %v630
        %633 = vset.pattern.permute.xlu0 8
        %634 = vperm.xlu0 %633, %v448
        %v635 = vpop.permute.xlu0 %634
        %v637 = vsub.f32 %v456, %v635
        %v638 = vsub.f32 %v460, %v635
        %639 = vset.pattern.permute.xlu0 28
        %640 = vperm.xlu0 %639, %v448
        %v641 = vpop.permute.xlu0 %640
        %v643 = vsub.f32 %v474, %v641
        %v644 = vsub.f32 %v478, %v641
        %v645 = vmul.f32 %v637, %v637
        %v646 = vmul.f32 %v638, %v638
        %v647 = vmul.f32 %v643, %v643
        %v648 = vmul.f32 %v644, %v644
        %v649 = vadd.f32 %v645, %v647
        %v650 = vadd.f32 %v646, %v648
        %v651 = vmin.f32 %v631, %v649
        %v652 = vmin.f32 %v632, %v650
        %653 = vset.pattern.permute.xlu0 9
        %654 = vperm.xlu0 %653, %v448
        %v655 = vpop.permute.xlu0 %654
        %v657 = vsub.f32 %v456, %v655
        %v658 = vsub.f32 %v460, %v655
        %659 = vset.pattern.permute.xlu0 29
        %660 = vperm.xlu0 %659, %v448
        %v661 = vpop.permute.xlu0 %660
        %v663 = vsub.f32 %v474, %v661
        %v664 = vsub.f32 %v478, %v661
        %v665 = vmul.f32 %v657, %v657
        %v666 = vmul.f32 %v658, %v658
        %v667 = vmul.f32 %v663, %v663
        %v668 = vmul.f32 %v664, %v664
        %v669 = vadd.f32 %v665, %v667
        %v670 = vadd.f32 %v666, %v668
        %v671 = vmin.f32 %v651, %v669
        %v672 = vmin.f32 %v652, %v670
        %673 = vset.pattern.permute.xlu0 10
        %674 = vperm.xlu0 %673, %v448
        %v675 = vpop.permute.xlu0 %674
        %v677 = vsub.f32 %v456, %v675
        %v678 = vsub.f32 %v460, %v675
        %679 = vset.pattern.permute.xlu0 30
        %680 = vperm.xlu0 %679, %v448
        %v681 = vpop.permute.xlu0 %680
        %v683 = vsub.f32 %v474, %v681
        %v684 = vsub.f32 %v478, %v681
        %v685 = vmul.f32 %v677, %v677
        %v686 = vmul.f32 %v678, %v678
        %v687 = vmul.f32 %v683, %v683
        %v688 = vmul.f32 %v684, %v684
        %v689 = vadd.f32 %v685, %v687
        %v690 = vadd.f32 %v686, %v688
        %v691 = vmin.f32 %v671, %v689
        %v692 = vmin.f32 %v672, %v690
        %693 = vset.pattern.permute.xlu0 11
        %694 = vperm.xlu0 %693, %v448
        %v695 = vpop.permute.xlu0 %694
        %v697 = vsub.f32 %v456, %v695
        %v698 = vsub.f32 %v460, %v695
        %699 = vset.pattern.permute.xlu0 31
        %700 = vperm.xlu0 %699, %v448
        %v701 = vpop.permute.xlu0 %700
        %v703 = vsub.f32 %v474, %v701
        %v704 = vsub.f32 %v478, %v701
        %v705 = vmul.f32 %v697, %v697
        %v706 = vmul.f32 %v698, %v698
        %v707 = vmul.f32 %v703, %v703
        %v708 = vmul.f32 %v704, %v704
        %v709 = vadd.f32 %v705, %v707
        %v710 = vadd.f32 %v706, %v708
        %v711 = vmin.f32 %v691, %v709
        %v712 = vmin.f32 %v692, %v710
        %713 = vset.pattern.permute.xlu0 12
        %714 = vperm.xlu0 %713, %v448
        %v715 = vpop.permute.xlu0 %714
        %v717 = vsub.f32 %v456, %v715
        %v718 = vsub.f32 %v460, %v715
        %719 = vset.pattern.permute.xlu0 32
        %720 = vperm.xlu0 %719, %v448
        %v721 = vpop.permute.xlu0 %720
        %v723 = vsub.f32 %v474, %v721
        %v724 = vsub.f32 %v478, %v721
        %v725 = vmul.f32 %v717, %v717
        %v726 = vmul.f32 %v718, %v718
        %v727 = vmul.f32 %v723, %v723
        %v728 = vmul.f32 %v724, %v724
        %v729 = vadd.f32 %v725, %v727
        %v730 = vadd.f32 %v726, %v728
        %v731 = vmin.f32 %v711, %v729
        %v732 = vmin.f32 %v712, %v730
        %733 = vset.pattern.permute.xlu0 13
        %734 = vperm.xlu0 %733, %v448
        %v735 = vpop.permute.xlu0 %734
        %v737 = vsub.f32 %v456, %v735
        %v738 = vsub.f32 %v460, %v735
        %739 = vset.pattern.permute.xlu0 33
        %740 = vperm.xlu0 %739, %v448
        %v741 = vpop.permute.xlu0 %740
        %v743 = vsub.f32 %v474, %v741
        %v744 = vsub.f32 %v478, %v741
        %v745 = vmul.f32 %v737, %v737
        %v746 = vmul.f32 %v738, %v738
        %v747 = vmul.f32 %v743, %v743
        %v748 = vmul.f32 %v744, %v744
        %v749 = vadd.f32 %v745, %v747
        %v750 = vadd.f32 %v746, %v748
        %v751 = vmin.f32 %v731, %v749
        %v752 = vmin.f32 %v732, %v750
        %753 = vset.pattern.permute.xlu0 14
        %754 = vperm.xlu0 %753, %v448
        %v755 = vpop.permute.xlu0 %754
        %v757 = vsub.f32 %v456, %v755
        %v758 = vsub.f32 %v460, %v755
        %759 = vset.pattern.permute.xlu0 34
        %760 = vperm.xlu0 %759, %v448
        %v761 = vpop.permute.xlu0 %760
        %v763 = vsub.f32 %v474, %v761
        %v764 = vsub.f32 %v478, %v761
        %v765 = vmul.f32 %v757, %v757
        %v766 = vmul.f32 %v758, %v758
        %v767 = vmul.f32 %v763, %v763
        %v768 = vmul.f32 %v764, %v764
        %v769 = vadd.f32 %v765, %v767
        %v770 = vadd.f32 %v766, %v768
        %v771 = vmin.f32 %v751, %v769
        %v772 = vmin.f32 %v752, %v770
        %773 = vset.pattern.permute.xlu0 15
        %774 = vperm.xlu0 %773, %v448
        %v775 = vpop.permute.xlu0 %774
        %v777 = vsub.f32 %v456, %v775
        %v778 = vsub.f32 %v460, %v775
        %779 = vset.pattern.permute.xlu0 35
        %780 = vperm.xlu0 %779, %v448
        %v781 = vpop.permute.xlu0 %780
        %v783 = vsub.f32 %v474, %v781
        %v784 = vsub.f32 %v478, %v781
        %v785 = vmul.f32 %v777, %v777
        %v786 = vmul.f32 %v778, %v778
        %v787 = vmul.f32 %v783, %v783
        %v788 = vmul.f32 %v784, %v784
        %v789 = vadd.f32 %v785, %v787
        %v790 = vadd.f32 %v786, %v788
        %v791 = vmin.f32 %v771, %v789
        %v792 = vmin.f32 %v772, %v790
        %793 = vset.pattern.permute.xlu0 16
        %794 = vperm.xlu0 %793, %v448
        %v795 = vpop.permute.xlu0 %794
        %v797 = vsub.f32 %v456, %v795
        %v798 = vsub.f32 %v460, %v795
        %799 = vset.pattern.permute.xlu0 36
        %800 = vperm.xlu0 %799, %v448
        %v801 = vpop.permute.xlu0 %800
        %v803 = vsub.f32 %v474, %v801
        %v804 = vsub.f32 %v478, %v801
        %v805 = vmul.f32 %v797, %v797
        %v806 = vmul.f32 %v798, %v798
        %v807 = vmul.f32 %v803, %v803
        %v808 = vmul.f32 %v804, %v804
        %v809 = vadd.f32 %v805, %v807
        %v810 = vadd.f32 %v806, %v808
        %v811 = vmin.f32 %v791, %v809
        %v812 = vmin.f32 %v792, %v810
        %813 = vset.pattern.permute.xlu0 17
        %814 = vperm.xlu0 %813, %v448
        %v815 = vpop.permute.xlu0 %814
        %v817 = vsub.f32 %v456, %v815
        %v818 = vsub.f32 %v460, %v815
        %819 = vset.pattern.permute.xlu0 37
        %820 = vperm.xlu0 %819, %v448
        %v821 = vpop.permute.xlu0 %820
        %v823 = vsub.f32 %v474, %v821
        %v824 = vsub.f32 %v478, %v821
        %v825 = vmul.f32 %v817, %v817
        %v826 = vmul.f32 %v818, %v818
        %v827 = vmul.f32 %v823, %v823
        %v828 = vmul.f32 %v824, %v824
        %v829 = vadd.f32 %v825, %v827
        %v830 = vadd.f32 %v826, %v828
        %v831 = vmin.f32 %v811, %v829
        %v832 = vmin.f32 %v812, %v830
        %833 = vset.pattern.permute.xlu0 18
        %834 = vperm.xlu0 %833, %v448
        %v835 = vpop.permute.xlu0 %834
        %v837 = vsub.f32 %v456, %v835
        %v838 = vsub.f32 %v460, %v835
        %839 = vset.pattern.permute.xlu0 38
        %840 = vperm.xlu0 %839, %v448
        %v841 = vpop.permute.xlu0 %840
        %v843 = vsub.f32 %v474, %v841
        %v844 = vsub.f32 %v478, %v841
        %v845 = vmul.f32 %v837, %v837
        %v846 = vmul.f32 %v838, %v838
        %v847 = vmul.f32 %v843, %v843
        %v848 = vmul.f32 %v844, %v844
        %v849 = vadd.f32 %v845, %v847
        %v850 = vadd.f32 %v846, %v848
        %v851 = vmin.f32 %v831, %v849
        %v852 = vmin.f32 %v832, %v850
        %853 = vset.pattern.permute.xlu0 19
        %854 = vperm.xlu0 %853, %v448
        %v855 = vpop.permute.xlu0 %854
        %v857 = vsub.f32 %v456, %v855
        %v858 = vsub.f32 %v460, %v855
        %859 = vset.pattern.permute.xlu0 39
        %860 = vperm.xlu0 %859, %v448
        %v861 = vpop.permute.xlu0 %860
        %v863 = vsub.f32 %v474, %v861
        %v864 = vsub.f32 %v478, %v861
        %v865 = vmul.f32 %v857, %v857
        %v866 = vmul.f32 %v858, %v858
        %v867 = vmul.f32 %v863, %v863
        %v868 = vmul.f32 %v864, %v864
        %v869 = vadd.f32 %v865, %v867
        %v870 = vadd.f32 %v866, %v868
        %v871 = vmin.f32 %v851, %v869
        %v872 = vmin.f32 %v852, %v870
        %v873 = vmul.f32 %v871, -200.0
        %v874 = vmul.f32 %v872, -200.0
        %v875 = vmul.f32 %v873, 1.442695
        %v876 = vpow.pop %v875
        %v877 = vmul.f32 %v874, 1.442695
        %v878 = vpow.pop %v877
        %v879 = vmul.f32 %v876, %v401
        %v880 = vmul.f32 %v878, %v402
        %v881 = vadd.f32 %v879, %v880
        %882 = vadd.xlane.f32.xlu0 %v881
        %v883 = vpop.xlane.xlu0 %882
        %v884 = vadd.f32 %v876, %v878
        %885 = vadd.xlane.f32.xlu0 %v884
        %v886 = vpop.xlane.xlu0 %885
        %vm887 = vcmp.eq.s32.totalorder %v398, 0
        %v888 = vsel %vm887, 1, 0
        %vm889 = vcmp.eq.s32.totalorder %v888, 1
        %v890 = vsel %vm889, %v435, 0.0
        %vm891 = vcmp.eq.s32.totalorder %v398, 1
        %v892 = vsel %vm891, 1, 0
        %vm893 = vcmp.eq.s32.totalorder %v892, 1
        %v894 = vsel %vm893, %v440, %v890
        %vm895 = vcmp.eq.s32.totalorder %v398, 2
        %v896 = vsel %vm895, 1, 0
        %vm897 = vcmp.eq.s32.totalorder %v896, 1
        %v898 = vsel %vm897, %v443, %v894
        %vm899 = vcmp.eq.s32.totalorder %v398, 3
        %v900 = vsel %vm899, 1, 0
        %vm901 = vcmp.eq.s32.totalorder %v900, 1
        %v902 = vsel %vm901, %v446, %v898
        %vm903 = vcmp.eq.s32.totalorder %v398, 4
        %v904 = vsel %vm903, 1, 0
        %vm905 = vcmp.eq.s32.totalorder %v904, 1
        %v906 = vsel %vm905, %v883, %v902
        %vm907 = vcmp.eq.s32.totalorder %v398, 5
        %v908 = vsel %vm907, 1, 0
        %vm909 = vcmp.eq.s32.totalorder %v908, 1
        %v910 = vsel %vm909, %v886, %v906
        %v911 = vld [vmem:[#allocation2] sm:$0xff]
        %v912 = vadd.f32 %v911, %v910
        %913 = vst [vmem:[#allocation2] sm:$0xff] %v912
        // Predicated region
        $region53: #{tpu_custom_call.1} parent=35 // pred_check
          %p914 = pneg %p392
        $region54: #{tpu_custom_call.1} parent=35 // pred_check_branch
          %916 = sbr.rel (%p914) target = $region56
        $region55: #{tpu_custom_call.1} parent=35 // pred_region
          %v917 = vld [vmem:[#allocation2] sm:$0xff]
          %s918 = sld [smem:[#allocation5 + %s38]]
          %v919 = vlaneseq
          %v920 = vshrl.u32 %v919, 7
          %v921 = vstv %s918
          %vm922 = vcmp.lt.s32.totalorder %v920, %v921
          %v923 = vsel %vm922, 1, 0
          %v924 = vcvt.s32.f32 %v923
          %v925 = vmul.f32 %v917, 0.00390625
          %v926 = vmul.f32 %v917, 2.0
          %v927 = vadd.f32 %v926, 1.0
          %929 = vrot.lane.b32.xlu0 %v917, 127
          %v930 = vpop.permute.xlu0 %929
          %v932 = vadd.f32 %v917, %v930
          %v933 = vadd.f32 %v932, 1.0
          %935 = vrot.lane.b32.xlu0 %v933, 127
          %v936 = vpop.permute.xlu0 %935
          %v938 = vrcp.pop %v936
          %v939 = vmul.f32 %v927, %v938
          %v940 = vsub.f32 1.0, %v939
          %942 = vrot.lane.b32.xlu0 %v940, 127
          %v943 = vpop.permute.xlu0 %942
          %v945 = vadd.f32 %v925, %v943
          %v946 = vmul.f32 %v924, %v945
          %vm947 = vcmask 7168
          %v948 = vsel %vm947, %v946, 0.0
          %949 = vadd.xlane.f32.xlu0 %v948
          %v950 = vpop.xlane.xlu0 %949
          %v951 = vrot.slane %v950, 4
          %v952 = vadd.f32 %v950, %v951
          %v953 = vrot.slane %v952, 2
          %v954 = vadd.f32 %v952, %v953
          %v955 = vrot.slane %v954, 1
          %v956 = vadd.f32 %v954, %v955
          %s957 = vtos %v956
          %958 = vrot.lane.b32.xlu0 %v917, 2
          %v959 = vpop.permute.xlu0 %958
          %v961 = vadd.f32 %v917, %v959
          %v962 = vadd.f32 %v961, 1.0
          %964 = vrot.lane.b32.xlu0 %v962, 127
          %v965 = vpop.permute.xlu0 %964
          %v967 = vrcp.pop %v965
          %v968 = vmul.f32 %v927, %v967
          %v969 = vsub.f32 1.0, %v968
          %v970 = vmul.f32 %v924, %v969
          %972 = vrot.lane.b32.xlu0 %v970, 124
          %v973 = vpop.permute.xlu0 %972
          %v975 = vsel %vm947, %v973, 0.0
          %976 = vadd.xlane.f32.xlu0 %v975
          %v977 = vpop.xlane.xlu0 %976
          %v978 = vrot.slane %v977, 4
          %v979 = vadd.f32 %v977, %v978
          %v980 = vrot.slane %v979, 2
          %v981 = vadd.f32 %v979, %v980
          %v982 = vrot.slane %v981, 1
          %v983 = vadd.f32 %v981, %v982
          %s984 = vtos %v983
          %vm985 = vcmask 23552
          %v986 = vsel %vm985, %v447, -inf
          %987 = vmax.xlane.f32.xlu0 %v986
          %v988 = vpop.xlane.xlu0 %987
          %v989 = vsub.f32 %v447, %v988
          %v990 = vmul.f32 %v989, 1.442695
          %v991 = vpow.pop %v990
          %v992 = vsel %vm985, %v991, 0.0
          %993 = vadd.xlane.f32.xlu0 %v992
          %v994 = vpop.xlane.xlu0 %993
          %v995 = vlog2.pop %v994
          %v996 = vmul.f32 %v995, 0.6931472
          %v997 = vadd.f32 %v988, %v996
          %999 = vrot.lane.b32.xlu0 %v447, 3
          %v1000 = vpop.permute.xlu0 %999
          %v1002 = vmul.f32 %v447, %v1000
          %1004 = vrot.lane.b32.xlu0 %v1002, 125
          %v1005 = vpop.permute.xlu0 %1004
          %v1007 = vsel %vm985, %v1005, 0.0
          %1008 = vadd.xlane.f32.xlu0 %v1007
          %v1009 = vpop.xlane.xlu0 %1008
          %v1010 = vsub.f32 %v997, %v1009
          %v1011 = vmul.f32 %v1010, %v447
          %1013 = vrot.lane.b32.xlu0 %v1011, 122
          %v1014 = vpop.permute.xlu0 %1013
          %v1016 = vsel %vm947, %v1014, 0.0
          %1017 = vadd.xlane.f32.xlu0 %v1016
          %v1018 = vpop.xlane.xlu0 %1017
          %v1019 = vrot.slane %v1018, 4
          %v1020 = vadd.f32 %v1018, %v1019
          %v1021 = vrot.slane %v1020, 2
          %v1022 = vadd.f32 %v1020, %v1021
          %v1023 = vrot.slane %v1022, 1
          %v1024 = vadd.f32 %v1022, %v1023
          %s1025 = vtos %v1024
          %s1026 = sld [smem:[#allocation4 + %s38]]
          %vm1027 = vcmp.eq.f32.partialorder %v447, %v988
          %v1028 = vsel %vm1027, %v398, 3
          %v1029 = vsel %vm985, %v1028, 2147483647
          %v1030 = vand.u32 %v1029, 65535
          %v1031 = vshra.s32 %v1029, 16
          %v1032 = vcvt.s32.f32 %v1030
          %v1033 = vcvt.s32.f32 %v1031
          %1034 = vmin.xlane.f32.xlu0 %v1033
          %v1035 = vpop.xlane.xlu0 %1034
          %vm1036 = vcmp.eq.f32.partialorder %v1033, %v1035
          %v1037 = vsel %vm1036, %v1032, inf
          %1038 = vmin.xlane.f32.xlu0 %v1037
          %v1039 = vpop.xlane.xlu0 %1038
          %v1040 = vcvt.f32.s32 %v1039
          %v1041 = vcvt.f32.s32 %v1035
          %v1042 = vshll.u32 %v1041, 16
          %v1043 = vadd.s32 %v1042, %v1040
          %v1044 = vadd.s32 %v1043, 1
          %v1045 = vstv %s1026
          %v1046 = vmul.u32 %v1044, %v1045
          %v1047 = vadd.s32 %v1046, 1
          %vm1048 = vcmp.lt.s32.totalorder %v398, %v1047
          %v1049 = vsel %vm1048, 1, 0
          %v1050 = vcvt.s32.f32 %v1049
          %1052 = vrot.lane.b32.xlu0 %v1050, 7
          %v1053 = vpop.permute.xlu0 %1052
          %v1055 = vmul.f32 %v447, %v1053
          %1056 = vrot.lane.b32.xlu0 %v447, 108
          %v1057 = vpop.permute.xlu0 %1056
          %v1059 = vmul.f32 %v447, %v1057
          %1061 = vrot.lane.b32.xlu0 %v1059, 108
          %v1062 = vpop.permute.xlu0 %1061
          %v1064 = vsub.f32 %v1055, %v1062
          %v1065 = vand.u32 2147483647, %v1064
          %1067 = vrot.lane.b32.xlu0 %v1065, 121
          %v1068 = vpop.permute.xlu0 %1067
          %vm1070 = vcmask 80896
          %v1071 = vsel %vm1070, %v1068, 0.0
          %1072 = vadd.xlane.f32.xlu0 %v1071
          %v1073 = vpop.xlane.xlu0 %1072
          %v1074 = vrot.slane %v1073, 4
          %v1075 = vadd.f32 %v1073, %v1074
          %v1076 = vrot.slane %v1075, 2
          %v1077 = vadd.f32 %v1075, %v1076
          %v1078 = vrot.slane %v1077, 1
          %v1079 = vadd.f32 %v1077, %v1078
          %s1080 = vtos %v1079
          %v1081 = vstv %s1080
          %1082 = vrot.lane.b32.xlu0 %v1050, 17
          %v1083 = vpop.permute.xlu0 %1082
          %v1085 = vmul.f32 %v447, %v1083
          %1086 = vrot.lane.b32.xlu0 %v447, 118
          %v1087 = vpop.permute.xlu0 %1086
          %v1089 = vmul.f32 %v447, %v1087
          %1091 = vrot.lane.b32.xlu0 %v1089, 108
          %v1092 = vpop.permute.xlu0 %1091
          %v1094 = vsub.f32 %v1085, %v1092
          %v1095 = vand.u32 2147483647, %v1094
          %1097 = vrot.lane.b32.xlu0 %v1095, 111
          %v1098 = vpop.permute.xlu0 %1097
          %v1100 = vsel %vm1070, %v1098, 0.0
          %1101 = vadd.xlane.f32.xlu0 %v1100
          %v1102 = vpop.xlane.xlu0 %1101
          %v1103 = vrot.slane %v1102, 4
          %v1104 = vadd.f32 %v1102, %v1103
          %v1105 = vrot.slane %v1104, 2
          %v1106 = vadd.f32 %v1104, %v1105
          %v1107 = vrot.slane %v1106, 1
          %v1108 = vadd.f32 %v1106, %v1107
          %s1109 = vtos %v1108
          %v1110 = vstv %s1109
          %v1111 = vadd.f32 %v1081, %v1110
          %1112 = vrot.lane.b32.xlu0 %v448, 88
          %v1113 = vpop.permute.xlu0 %1112
          %v1115 = vsub.f32 %v448, %v1113
          %v1116 = vand.u32 2147483647, %v1115
          %vm1117 = vcmask 162816
          %v1118 = vsel %vm1117, %v1116, 0.0
          %1119 = vadd.xlane.f32.xlu0 %v1118
          %v1120 = vpop.xlane.xlu0 %1119
          %v1121 = vrot.slane %v1120, 4
          %v1122 = vadd.f32 %v1120, %v1121
          %v1123 = vrot.slane %v1122, 2
          %v1124 = vadd.f32 %v1122, %v1123
          %v1125 = vrot.slane %v1124, 1
          %v1126 = vadd.f32 %v1124, %v1125
          %s1127 = vtos %v1126
          %v1128 = vstv %s1127
          %1130 = vrot.lane.b32.xlu0 %v1116, 108
          %v1131 = vpop.permute.xlu0 %1130
          %v1133 = vsel %vm1117, %v1131, 0.0
          %1134 = vadd.xlane.f32.xlu0 %v1133
          %v1135 = vpop.xlane.xlu0 %1134
          %v1136 = vrot.slane %v1135, 4
          %v1137 = vadd.f32 %v1135, %v1136
          %v1138 = vrot.slane %v1137, 2
          %v1139 = vadd.f32 %v1137, %v1138
          %v1140 = vrot.slane %v1139, 1
          %v1141 = vadd.f32 %v1139, %v1140
          %s1142 = vtos %v1141
          %v1143 = vstv %s1142
          %v1144 = vadd.f32 %v1128, %v1143
          %v1145 = vstv %s957
          %v1146 = vsel %vm887, %v1145, 0.0
          %v1147 = vstv %s1025
          %v1148 = vsel %vm891, %v1147, %v1146
          %v1149 = vsel %vm895, %v1111, %v1148
          %v1150 = vsel %vm899, %v1144, %v1149
          %v1151 = vstv %s984
          %v1152 = vsel %vm903, %v1151, %v1150
          %1153 = vst [vmem:[%s370] sm:$0x1] %v1152
        $region56: #{tpu_custom_call.1} parent=35 // pred_fallthru
          _
        %s1154 = sand.u32 %s188, 1
        %s1155 = scalar_lea.sflag [#allocation8], %s1154
        %s1156 = sand.u32 %s188, 1
        %s1157 = scalar_lea.vmem [#allocation12], %s1156
        // Predicated region
        $region57: #{tpu_custom_call.1} parent=35 // pred_check
          %p1158 = pneg %p198
        $region58: #{tpu_custom_call.1} parent=35 // pred_check_branch
          %1160 = sbr.rel (%p1158) target = $region60
        $region59: #{tpu_custom_call.1} parent=35 // pred_region
          %s1162 = ssub.s32 16, 16
          %1163 = vsyncadd %s1155, %s1162
          %s1164 = smul.addr %s38, 16
          %s1165 = scalar_lea.hbm %s6, %s1164
          %s1167 = sshll.u32 %s1157, 4
          %s1168 = int_to_ptr.vmem [resolvable:$true] %s1167
          %1170 = dma.vmem_to_hbm [thread:$0]  %s1168, 16, %s1165, %s1155
        $region60: #{tpu_custom_call.1} parent=35 // pred_fallthru
          _
      $region36: #{tpu_custom_call.1} parent=5 // pred_fallthru
        _
      %p1171 = scmp.le.s32.totalorder 2, %s29
      // Predicated region
      $region61: #{tpu_custom_call.1} parent=5 // pred_check
        %p1172 = pneg %p1171
      $region62: #{tpu_custom_call.1} parent=5 // pred_check_branch
        %1174 = sbr.rel (%p1172) target = $region64
      $region63: #{tpu_custom_call.1} parent=5 // pred_region
        %s1175 = ssub.s32 %s29, 2
        // Predicated region
        $region65: #{tpu_custom_call.1} parent=63 // pred_check
          %p1176 = pneg %p204
        $region66: #{tpu_custom_call.1} parent=63 // pred_check_branch
          %1178 = sbr.rel (%p1176) target = $region68
        $region67: #{tpu_custom_call.1} parent=63 // pred_region
          %s1179 = sand.u32 %s189, 1
          %s1180 = scalar_lea.sflag [#allocation8], %s1179
          %s1181 = sand.u32 %s189, 1
          %s1182 = scalar_lea.vmem [#allocation12], %s1181
          %1183 = dma.done %s1180, 16
        $region68: #{tpu_custom_call.1} parent=63 // pred_fallthru
          _
      $region64: #{tpu_custom_call.1} parent=5 // pred_fallthru
        _
    $region6: #{tpu_custom_call.1} parent=1 // loop_footer
      %s33 = sadd.s32 1, %s29
    $region7: #{tpu_custom_call.1} parent=1 // loop_footer_branch
      %28 = sbr.rel target = $region3
    $region8: #{tpu_custom_call.1} parent=1 // loop_exit
      _
    %1184 = vsyncpa [#allocation7], 1
    %s1185 = scalar_lea.sflag [#allocation7], 1
    %1186 = vsyncpa %s1185, 1
    %1187 = vsyncpa [#allocation10], 1
    %s1188 = scalar_lea.sflag [#allocation10], 1
    %1189 = vsyncpa %s1188, 1
    %1190 = vsyncpa [#allocation8], 1
    %s1191 = scalar_lea.sflag [#allocation8], 1
    %1192 = vsyncpa %s1191, 1

</llo_original>
